<compile_context>
chip_gen: v7x
topology: tpu7x:2x2x1
jax: 0.10.0
libtpu: 0.0.40
codegen_flags: <defaults>
</compile_context>

<pallas_src>
import jax
import jax.numpy as jnp
from jax.experimental import pallas as pl
from jax.experimental.pallas import tpu as pltpu

IN_DIM = 28 * 28          # 784
H1_PAD = 384              # 300 padded up to a multiple of 128
H2_PAD = 128              # 100 padded up to a full lane width
OUT_PAD = 128             # 10 padded up to a full lane width
OUT_DIM = 10


def _round_up(x, m):
    return ((x + m - 1) // m) * m


def _pick_tile_n(n, max_tile=1024):
    """Batch tile: >=16 rows always, 256-aligned when the batch is large,
    capped so there are >=2 grid steps when N > 256 (v7x megacore), and at
    most max_tile rows."""
    if n <= 256:
        return max(16, _round_up(n, 16))
    return max(256, min(max_tile, _round_up(pl.cdiv(n, 2), 256)))


def _lenet300_kernel(x_ref, w1_ref, b1_ref, w2_ref, b2_ref, w3_ref, b3_ref,
                     o_ref):
    # x_ref: f32 [TILE_N, 784] (cast to bf16 here, fused with layer 1);
    # w1: bf16 [784, 384]; w2: bf16 [384, 128]; w3: bf16 [128, 128];
    # biases: f32 [1, H]. All matmuls run on the MXU with f32 accumulation;
    # bias-add and ReLU stay in f32.
    x = x_ref[...].astype(jnp.bfloat16)
    h1 = jnp.dot(x, w1_ref[...], preferred_element_type=jnp.float32) + b1_ref[...]
    h1 = jnp.maximum(h1, 0.0).astype(jnp.bfloat16)
    h2 = jnp.dot(h1, w2_ref[...], preferred_element_type=jnp.float32) + b2_ref[...]
    h2 = jnp.maximum(h2, 0.0).astype(jnp.bfloat16)
    logits = (jnp.dot(h2, w3_ref[...], preferred_element_type=jnp.float32)
              + b3_ref[...])
    o_ref[...] = logits.astype(o_ref.dtype)


def lenet_300_100_forward(x_nchw, params, max_tile_n=1024,
                          out_dtype=jnp.bfloat16):
    """x_nchw: [N, 1, 28, 28] -> logits [N, 10] in out_dtype (bf16 default)."""
    n = x_nchw.shape[0]
    # Flatten exactly like x.view(-1, num_flat_features(x)); keep the HBM
    # dtype — the bf16 cast happens inside the kernel on the VMEM tile.
    x2d = x_nchw.reshape(n, -1)
    assert x2d.shape[1] == IN_DIM

    w1, b1, w2, b2, w3, b3 = params

    tile_n = _pick_tile_n(n, max_tile_n)
    # No batch padding: Pallas masks the trailing partial block; junk rows in
    # the tail are never written to the [n, OUT_PAD] output.
    grid = (pl.cdiv(n, tile_n),)

    out = pl.pallas_call(
        _lenet300_kernel,
        out_shape=jax.ShapeDtypeStruct((n, OUT_PAD), out_dtype),
        grid=grid,
        in_specs=[
            # Streamed (double-buffered) per batch tile, in the input's HBM dtype.
            pl.BlockSpec((tile_n, IN_DIM), lambda i: (i, 0)),
            # Weights / biases: constant index_map -> fetched once, VMEM-resident
            # across all grid steps.
            pl.BlockSpec((IN_DIM, H1_PAD), lambda i: (0, 0)),
            pl.BlockSpec((1, H1_PAD), lambda i: (0, 0)),
            pl.BlockSpec((H1_PAD, H2_PAD), lambda i: (0, 0)),
            pl.BlockSpec((1, H2_PAD), lambda i: (0, 0)),
            pl.BlockSpec((H2_PAD, OUT_PAD), lambda i: (0, 0)),
            pl.BlockSpec((1, OUT_PAD), lambda i: (0, 0)),
        ],
        out_specs=pl.BlockSpec((tile_n, OUT_PAD), lambda i: (i, 0)),
        compiler_params=pltpu.CompilerParams(
            # Batch axis shards across v7x's two TensorCores.
            dimension_semantics=("parallel",),
            # Larger f32 input tiles would overflow v5e's 16 MiB default
            # scoped-VMEM budget; 32 MiB is far below physical VMEM everywhere.
            vmem_limit_bytes=32 * 1024 * 1024,
        ),
    )(x2d, w1, b1, w2, b2, w3, b3)

    # Drop the zero-padded logit lanes. (For best perf, fuse this slice into
    # the downstream consumer (loss/argmax) instead of materializing it.)
    return out[:, :OUT_DIM]


def init_params(key):
    """Deterministic params, pre-transposed to [in, out], zero-padded to
    lane-friendly shapes. Weights in bf16, biases in f32 [1, out_pad]."""
    k1, k2, k3, k4, k5, k6 = jax.random.split(key, 6)

    def linear(kw, kb, fan_in, fan_out, in_pad, out_pad):
        # Match nn.Linear default init: U(-1/sqrt(fan_in), 1/sqrt(fan_in)).
        bound = 1.0 / jnp.sqrt(jnp.float32(fan_in))
        w = jax.random.uniform(kw, (fan_in, fan_out), jnp.float32, -bound, bound)
        b = jax.random.uniform(kb, (1, fan_out), jnp.float32, -bound, bound)
        # Zero-pad to padded shapes (inert under matmul + ReLU).
        w = jnp.pad(w, ((0, in_pad - fan_in), (0, out_pad - fan_out)))
        b = jnp.pad(b, ((0, 0), (0, out_pad - fan_out)))
        return w.astype(jnp.bfloat16), b.astype(jnp.float32)

    w1, b1 = linear(k1, k2, IN_DIM, 300, IN_DIM, H1_PAD)
    w2, b2 = linear(k3, k4, 300, 100, H1_PAD, H2_PAD)
    w3, b3 = linear(k5, k6, 100, OUT_DIM, H2_PAD, OUT_PAD)
    return (w1, b1, w2, b2, w3, b3)


if __name__ == "__main__":
    key = jax.random.PRNGKey(0)
    kx, kp = jax.random.split(key)

    # Small batch; spatial shape fixed by the module (28x28 MNIST-style input).
    x = jax.random.normal(kx, (2, 1, 28, 28), dtype=jnp.float32)
    params = init_params(kp)

    out = lenet_300_100_forward(x, params)
    out = jax.block_until_ready(out)
    assert out.shape == (2, OUT_DIM)

    # Pure-JAX reference of the same math (bf16 operands, f32 accumulation,
    # bf16 logits).
    w1, b1, w2, b2, w3, b3 = params
    xb = x.reshape(x.shape[0], -1).astype(jnp.bfloat16)
    h1 = jnp.maximum(
        jnp.dot(xb, w1, preferred_element_type=jnp.float32) + b1, 0.0
    ).astype(jnp.bfloat16)
    h2 = jnp.maximum(
        jnp.dot(h1, w2, preferred_element_type=jnp.float32) + b2, 0.0
    ).astype(jnp.bfloat16)
    ref = (jnp.dot(h2, w3, preferred_element_type=jnp.float32) + b3)[:, :OUT_DIM]
    ref = ref.astype(jnp.bfloat16).astype(jnp.float32)

    out_f32 = out.astype(jnp.float32)
    max_err = jnp.max(jnp.abs(out_f32 - ref))
    assert jnp.allclose(out_f32, ref, atol=2e-2, rtol=2e-2), max_err

    print("KERNEL_OK")
</pallas_src>

<mosaic_0001>
module attributes {stable_mosaic.version = 11 : i64} {
  func.func @_lenet300_kernel(%arg0: i32, %arg1: memref<16x784xf32, #tpu.memory_space<vmem>>, %arg2: memref<784x384xbf16, #tpu.memory_space<vmem>>, %arg3: memref<1x384xf32, #tpu.memory_space<vmem>>, %arg4: memref<384x128xbf16, #tpu.memory_space<vmem>>, %arg5: memref<1x128xf32, #tpu.memory_space<vmem>>, %arg6: memref<128x128xbf16, #tpu.memory_space<vmem>>, %arg7: memref<1x128xf32, #tpu.memory_space<vmem>>, %arg8: memref<16x128xbf16, #tpu.memory_space<vmem>>) attributes {dimension_semantics = [#tpu.dimension_semantics<parallel>], iteration_bounds = array<i64: 1>, scalar_prefetch = 0 : i64, scratch_operands = 0 : i64, tpu.core_type = #tpu.core_type<tc>, window_params = [{transform_indices = @transform_0, window_bounds = array<i64: 16, 784>}, {pipeline_mode = #tpu.pipeline_mode<synchronous>, transform_indices = @transform_1, window_bounds = array<i64: 784, 384>}, {pipeline_mode = #tpu.pipeline_mode<synchronous>, transform_indices = @transform_2, window_bounds = array<i64: 1, 384>}, {pipeline_mode = #tpu.pipeline_mode<synchronous>, transform_indices = @transform_3, window_bounds = array<i64: 384, 128>}, {pipeline_mode = #tpu.pipeline_mode<synchronous>, transform_indices = @transform_4, window_bounds = array<i64: 1, 128>}, {pipeline_mode = #tpu.pipeline_mode<synchronous>, transform_indices = @transform_5, window_bounds = array<i64: 128, 128>}, {pipeline_mode = #tpu.pipeline_mode<synchronous>, transform_indices = @transform_6, window_bounds = array<i64: 1, 128>}, {transform_indices = @transform_7, window_bounds = array<i64: 16, 128>}]} {
    %c0 = arith.constant 0 : index
    %c0_0 = arith.constant 0 : index
    %0 = vector.load %arg1[%c0, %c0_0] : memref<16x784xf32, #tpu.memory_space<vmem>>, vector<16x784xf32>
    %1 = arith.truncf %0 : vector<16x784xf32> to vector<16x784xbf16>
    %c0_1 = arith.constant 0 : index
    %c0_2 = arith.constant 0 : index
    %2 = vector.load %arg2[%c0_1, %c0_2] : memref<784x384xbf16, #tpu.memory_space<vmem>>, vector<784x384xbf16>
    %cst = arith.constant dense<0.000000e+00> : vector<16x384xf32>
    %3 = tpu.matmul %1, %2, %cst {dimension_numbers = #tpu.dot_dimension_numbers<[1], [0], [0], [1], [0, 0, 1, 1], [], []>} : vector<16x784xbf16>, vector<784x384xbf16>, vector<16x384xf32> -> vector<16x384xf32>
    %c0_3 = arith.constant 0 : index
    %c0_4 = arith.constant 0 : index
    %4 = vector.load %arg3[%c0_3, %c0_4] : memref<1x384xf32, #tpu.memory_space<vmem>>, vector<1x384xf32>
    %5 = vector.broadcast %4 : vector<1x384xf32> to vector<16x384xf32>
    %6 = arith.addf %3, %5 : vector<16x384xf32>
    %cst_5 = arith.constant 0.000000e+00 : f32
    %7 = vector.broadcast %cst_5 : f32 to vector<16x384xf32>
    %8 = arith.maximumf %6, %7 : vector<16x384xf32>
    %9 = arith.truncf %8 : vector<16x384xf32> to vector<16x384xbf16>
    %c0_6 = arith.constant 0 : index
    %c0_7 = arith.constant 0 : index
    %10 = vector.load %arg4[%c0_6, %c0_7] : memref<384x128xbf16, #tpu.memory_space<vmem>>, vector<384x128xbf16>
    %cst_8 = arith.constant dense<0.000000e+00> : vector<16x128xf32>
    %11 = tpu.matmul %9, %10, %cst_8 {dimension_numbers = #tpu.dot_dimension_numbers<[1], [0], [0], [1], [0, 0, 1, 1], [], []>} : vector<16x384xbf16>, vector<384x128xbf16>, vector<16x128xf32> -> vector<16x128xf32>
    %c0_9 = arith.constant 0 : index
    %c0_10 = arith.constant 0 : index
    %12 = vector.load %arg5[%c0_9, %c0_10] : memref<1x128xf32, #tpu.memory_space<vmem>>, vector<1x128xf32>
    %13 = vector.broadcast %12 : vector<1x128xf32> to vector<16x128xf32>
    %14 = arith.addf %11, %13 : vector<16x128xf32>
    %cst_11 = arith.constant 0.000000e+00 : f32
    %15 = vector.broadcast %cst_11 : f32 to vector<16x128xf32>
    %16 = arith.maximumf %14, %15 : vector<16x128xf32>
    %17 = arith.truncf %16 : vector<16x128xf32> to vector<16x128xbf16>
    %c0_12 = arith.constant 0 : index
    %c0_13 = arith.constant 0 : index
    %18 = vector.load %arg6[%c0_12, %c0_13] : memref<128x128xbf16, #tpu.memory_space<vmem>>, vector<128x128xbf16>
    %cst_14 = arith.constant dense<0.000000e+00> : vector<16x128xf32>
    %19 = tpu.matmul %17, %18, %cst_14 {dimension_numbers = #tpu.dot_dimension_numbers<[1], [0], [0], [1], [0, 0, 1, 1], [], []>} : vector<16x128xbf16>, vector<128x128xbf16>, vector<16x128xf32> -> vector<16x128xf32>
    %c0_15 = arith.constant 0 : index
    %c0_16 = arith.constant 0 : index
    %20 = vector.load %arg7[%c0_15, %c0_16] : memref<1x128xf32, #tpu.memory_space<vmem>>, vector<1x128xf32>
    %21 = vector.broadcast %20 : vector<1x128xf32> to vector<16x128xf32>
    %22 = arith.addf %19, %21 : vector<16x128xf32>
    %23 = arith.truncf %22 : vector<16x128xf32> to vector<16x128xbf16>
    %c0_17 = arith.constant 0 : index
    %c0_18 = arith.constant 0 : index
    %24 = vector.load %arg8[%c0_17, %c0_18] : memref<16x128xbf16, #tpu.memory_space<vmem>>, vector<16x128xbf16>
    tpu.vector_store %arg8[%c0_17, %c0_18], %23 {strides = array<i32>} : memref<16x128xbf16, #tpu.memory_space<vmem>>, vector<16x128xbf16>,
    return
  }
  func.func @transform_0(%arg0: i32) -> (i32, i32) {
    %c0_i32 = arith.constant 0 : i32
    %c0_i32_0 = arith.constant 0 : i32
    return %arg0, %c0_i32 : i32, i32
  }
  func.func @transform_1(%arg0: i32) -> (i32, i32) {
    %c0_i32 = arith.constant 0 : i32
    %c0_i32_0 = arith.constant 0 : i32
    %c0_i32_1 = arith.constant 0 : i32
    return %c0_i32, %c0_i32_0 : i32, i32
  }
  func.func @transform_2(%arg0: i32) -> (i32, i32) {
    %c0_i32 = arith.constant 0 : i32
    %c0_i32_0 = arith.constant 0 : i32
    %c0_i32_1 = arith.constant 0 : i32
    return %c0_i32, %c0_i32_0 : i32, i32
  }
  func.func @transform_3(%arg0: i32) -> (i32, i32) {
    %c0_i32 = arith.constant 0 : i32
    %c0_i32_0 = arith.constant 0 : i32
    %c0_i32_1 = arith.constant 0 : i32
    return %c0_i32, %c0_i32_0 : i32, i32
  }
  func.func @transform_4(%arg0: i32) -> (i32, i32) {
    %c0_i32 = arith.constant 0 : i32
    %c0_i32_0 = arith.constant 0 : i32
    %c0_i32_1 = arith.constant 0 : i32
    return %c0_i32, %c0_i32_0 : i32, i32
  }
  func.func @transform_5(%arg0: i32) -> (i32, i32) {
    %c0_i32 = arith.constant 0 : i32
    %c0_i32_0 = arith.constant 0 : i32
    %c0_i32_1 = arith.constant 0 : i32
    return %c0_i32, %c0_i32_0 : i32, i32
  }
  func.func @transform_6(%arg0: i32) -> (i32, i32) {
    %c0_i32 = arith.constant 0 : i32
    %c0_i32_0 = arith.constant 0 : i32
    %c0_i32_1 = arith.constant 0 : i32
    return %c0_i32, %c0_i32_0 : i32, i32
  }
  func.func @transform_7(%arg0: i32) -> (i32, i32) {
    %c0_i32 = arith.constant 0 : i32
    %c0_i32_0 = arith.constant 0 : i32
    return %arg0, %c0_i32 : i32, i32
  }
}

</mosaic_0001>

<llo_original>
// kernel: tpu_custom_call.1
$region0: #{tpu_custom_call.1}
  #allocation0 [shape = 'u32[]', space=smem, size = 0x4, offset = 0x4, fixed_abs, tag = 'smem constant byte address 0x4 - core index']
  #allocation1 [shape = 'u32[144,128]{1,0:T(1,128)}', space=vmem, size = 0x12000, scoped, tag = 'internal scratch']
  %s0 = inlined_call_operand.hbm [shape: f32[2,784], index: 0, kind: input, shape index: {}]
  %s1 = inlined_call_operand.hbm [shape: bf16[784,384], index: 1, kind: input, shape index: {}]
  %s2 = inlined_call_operand.vmem [shape: f32[1,384], index: 2, kind: input, shape index: {}]
  %s3 = inlined_call_operand.hbm [shape: bf16[384,128], index: 3, kind: input, shape index: {}]
  %s4 = inlined_call_operand.vmem [shape: f32[1,128], index: 4, kind: input, shape index: {}]
  %s5 = inlined_call_operand.hbm [shape: bf16[128,128], index: 5, kind: input, shape index: {}]
  %s6 = inlined_call_operand.vmem [shape: f32[1,128], index: 6, kind: input, shape index: {}]
  %s7 = inlined_call_operand.hbm [shape: bf16[2,128], index: 7, kind: output, shape index: {}]
  %s8 = sld [smem:[#allocation0]]
  $region54: #{tpu_custom_call.1} parent=0
    _
  %s10 = ssub.s32 1, %s8
  %s11 = scalar_select 0, %s10, %s8
  $region1: #{tpu_custom_call.1} parent=0
    #allocation2 [shape = 'u8[57344]{0}', space=vmem, size = 0xe000, scoped, tag = 'input window, operand 0, single buffered']
    #allocation3 [shape = 's32[1]{0}', space=sflag, size = 0x4, scoped, tag = 'scoped memory for tpu_custom_call.1']
    #allocation4 [shape = 's32[1]{0}', space=sflag, size = 0x4, scoped, tag = 'scoped memory for tpu_custom_call.1']
    #allocation5 [shape = 'u8[602112]{0}', space=vmem, size = 0x93000, scoped, tag = 'input window, operand 1, single buffered']
    #allocation6 [shape = 's32[1]{0}', space=sflag, size = 0x4, scoped, tag = 'scoped memory for tpu_custom_call.1']
    #allocation7 [shape = 'u8[98304]{0}', space=vmem, size = 0x18000, scoped, tag = 'input window, operand 3, single buffered']
    #allocation8 [shape = 'u8[32768]{0}', space=vmem, size = 0x8000, scoped, tag = 'input window, operand 5, single buffered']
    #allocation9 [shape = 's32[1]{0}', space=sflag, size = 0x4, scoped, tag = 'scoped memory for tpu_custom_call.1']
    #allocation10 [shape = 'u8[4096]{0}', space=vmem, size = 0x1000, scoped, tag = 'output window, operand 0, single buffered']
    %12 = vsyncpa [#allocation3], 0
    %13 = vsyncpa [#allocation6], 0
    %14 = vsyncpa [#allocation9], 0
    %15 = vsyncpa [#allocation4], 0
    // Predicated region
    $region2: #{tpu_custom_call.1} parent=1 // pred_check
      _
    $region3: #{tpu_custom_call.1} parent=1 // pred_check_branch
      %17 = sbr.rel (0) target = $region5
    $region4: #{tpu_custom_call.1} parent=1 // pred_region
      %s19 = ssub.s32 1792, 224
      %20 = vsyncadd [#allocation3], %s19
      %s21 = sshll.u32 [#allocation2], 4
      %s22 = int_to_ptr.vmem [resolvable:$true] %s21
      %27 = dma.hbm_to_vmem [thread:$0]  %s0, 224, %s22, [#allocation3], 224, 224, 14
    $region5: #{tpu_custom_call.1} parent=1 // pred_fallthru
      _
    // Predicated region
    $region6: #{tpu_custom_call.1} parent=1 // pred_check
      _
    $region7: #{tpu_custom_call.1} parent=1 // pred_check_branch
      %29 = sbr.rel (0) target = $region9
    $region8: #{tpu_custom_call.1} parent=1 // pred_region
      %s31 = ssub.s32 18816, 18816
      %32 = vsyncadd [#allocation6], %s31
      %s33 = sshll.u32 [#allocation5], 4
      %s34 = int_to_ptr.vmem [resolvable:$true] %s33
      %39 = dma.hbm_to_vmem [thread:$0]  %s1, 18816, %s34, [#allocation6], 192, 192, 12
    $region9: #{tpu_custom_call.1} parent=1 // pred_fallthru
      _
    // Predicated region
    $region10: #{tpu_custom_call.1} parent=1 // pred_check
      _
    $region11: #{tpu_custom_call.1} parent=1 // pred_check_branch
      %41 = sbr.rel (0) target = $region13
    $region12: #{tpu_custom_call.1} parent=1 // pred_region
      _
    $region13: #{tpu_custom_call.1} parent=1 // pred_fallthru
      _
    // Predicated region
    $region14: #{tpu_custom_call.1} parent=1 // pred_check
      _
    $region15: #{tpu_custom_call.1} parent=1 // pred_check_branch
      %43 = sbr.rel (0) target = $region17
    $region16: #{tpu_custom_call.1} parent=1 // pred_region
      %s45 = ssub.s32 3072, 3072
      %46 = vsyncadd [#allocation6], %s45
      %s47 = sshll.u32 [#allocation7], 4
      %s48 = int_to_ptr.vmem [resolvable:$true] %s47
      %53 = dma.hbm_to_vmem [thread:$0]  %s3, 3072, %s48, [#allocation6], 64, 64, 4
    $region17: #{tpu_custom_call.1} parent=1 // pred_fallthru
      _
    // Predicated region
    $region18: #{tpu_custom_call.1} parent=1 // pred_check
      _
    $region19: #{tpu_custom_call.1} parent=1 // pred_check_branch
      %55 = sbr.rel (0) target = $region21
    $region20: #{tpu_custom_call.1} parent=1 // pred_region
      _
    $region21: #{tpu_custom_call.1} parent=1 // pred_fallthru
      _
    // Predicated region
    $region22: #{tpu_custom_call.1} parent=1 // pred_check
      _
    $region23: #{tpu_custom_call.1} parent=1 // pred_check_branch
      %57 = sbr.rel (0) target = $region25
    $region24: #{tpu_custom_call.1} parent=1 // pred_region
      %s59 = ssub.s32 1024, 1024
      %60 = vsyncadd [#allocation9], %s59
      %s61 = sshll.u32 [#allocation8], 4
      %s62 = int_to_ptr.vmem [resolvable:$true] %s61
      %67 = dma.hbm_to_vmem [thread:$0]  %s5, 1024, %s62, [#allocation9], 64, 64, 4
    $region25: #{tpu_custom_call.1} parent=1 // pred_fallthru
      _
    // Predicated region
    $region26: #{tpu_custom_call.1} parent=1 // pred_check
      _
    $region27: #{tpu_custom_call.1} parent=1 // pred_check_branch
      %69 = sbr.rel (0) target = $region29
    $region28: #{tpu_custom_call.1} parent=1 // pred_region
      _
    $region29: #{tpu_custom_call.1} parent=1 // pred_fallthru
      _
    // Predicated region
    $region30: #{tpu_custom_call.1} parent=1 // pred_check
      _
    $region31: #{tpu_custom_call.1} parent=1 // pred_check_branch
      %71 = sbr.rel (0) target = $region33
    $region32: #{tpu_custom_call.1} parent=1 // pred_region
      %72 = dma.done [#allocation3], 1792
    $region33: #{tpu_custom_call.1} parent=1 // pred_fallthru
      _
    // Predicated region
    $region34: #{tpu_custom_call.1} parent=1 // pred_check
      _
    $region35: #{tpu_custom_call.1} parent=1 // pred_check_branch
      %74 = sbr.rel (0) target = $region37
    $region36: #{tpu_custom_call.1} parent=1 // pred_region
      %75 = dma.done [#allocation6], 18816
    $region37: #{tpu_custom_call.1} parent=1 // pred_fallthru
      _
    // Predicated region
    $region38: #{tpu_custom_call.1} parent=1 // pred_check
      _
    $region39: #{tpu_custom_call.1} parent=1 // pred_check_branch
      %77 = sbr.rel (0) target = $region41
    $region40: #{tpu_custom_call.1} parent=1 // pred_region
      %78 = dma.done [#allocation6], 3072
    $region41: #{tpu_custom_call.1} parent=1 // pred_fallthru
      _
    // Predicated region
    $region42: #{tpu_custom_call.1} parent=1 // pred_check
      _
    $region43: #{tpu_custom_call.1} parent=1 // pred_check_branch
      %80 = sbr.rel (0) target = $region45
    $region44: #{tpu_custom_call.1} parent=1 // pred_region
      %81 = dma.done [#allocation9], 1024
    $region45: #{tpu_custom_call.1} parent=1 // pred_fallthru
      _
    %v83 = vld [vmem:[#allocation2] sm:$0xff]
    %v84 = vld [vmem:[#allocation2 + $0x8] sm:$0x3f]
    %v85 = vld [vmem:[#allocation2 + $0xe] sm:$0xff]
    %v86 = vld [vmem:[#allocation2 + $0x16] sm:$0x3f]
    %v87 = vld [vmem:[#allocation2 + $0x1c] sm:$0xff]
    %v88 = vld [vmem:[#allocation2 + $0x24] sm:$0x3f]
    %v89 = vld [vmem:[#allocation2 + $0x2a] sm:$0xff]
    %v90 = vld [vmem:[#allocation2 + $0x32] sm:$0x3f]
    %v91 = vld [vmem:[#allocation2 + $0x38] sm:$0xff]
    %v92 = vld [vmem:[#allocation2 + $0x40] sm:$0x3f]
    %v93 = vld [vmem:[#allocation2 + $0x46] sm:$0xff]
    %v94 = vld [vmem:[#allocation2 + $0x4e] sm:$0x3f]
    %v95 = vld [vmem:[#allocation2 + $0x54] sm:$0xff]
    %v96 = vld [vmem:[#allocation2 + $0x5c] sm:$0x3f]
    %v97 = vld [vmem:[#allocation2 + $0x62] sm:$0xff]
    %v98 = vld [vmem:[#allocation2 + $0x6a] sm:$0x3f]
    %v115 = vcombine.low %v83, %v85
    %v116 = vcombine.high %v83, %v85
    %v117 = vcombine.low %v87, %v89
    %v118 = vcombine.high %v87, %v89
    %v120 = vunpack.c.l.s4 1983009808
    %v121 = vunpack.c.0.s8 %v120
    %v122 = vlaneseq
    %v123 = vshrl.u32 %v122, 7
    %v124 = vsub.s32 %v121, %v123
    %v125 = vrot.slane %v115, %v124
    %v127 = vunpack.c.l.s4 1983009808
    %v128 = vunpack.c.0.s8 %v127
    %v129 = vlaneseq
    %v130 = vshrl.u32 %v129, 7
    %v131 = vsub.s32 %v128, %v130
    %v132 = vrot.slane %v116, %v131
    %v134 = vunpack.c.l.s4 1983009808
    %v135 = vunpack.c.0.s8 %v134
    %v136 = vlaneseq
    %v137 = vshrl.u32 %v136, 7
    %v138 = vsub.s32 %v135, %v137
    %v139 = vrot.slane %v117, %v138
    %v141 = vunpack.c.l.s4 1983009808
    %v142 = vunpack.c.0.s8 %v141
    %v143 = vlaneseq
    %v144 = vshrl.u32 %v143, 7
    %v145 = vsub.s32 %v142, %v144
    %v146 = vrot.slane %v118, %v145
    %v147 = vcombine.low %v125, %v139
    %v148 = vcombine.high %v125, %v139
    %v149 = vcombine.low %v132, %v146
    %v150 = vcombine.high %v132, %v146
    %v151 = vcombine.low %v84, %v86
    %v152 = vcombine.high %v84, %v86
    %v153 = vcombine.low %v88, %v90
    %v154 = vcombine.high %v88, %v90
    %v156 = vunpack.c.l.s4 1983009808
    %v157 = vunpack.c.0.s8 %v156
    %v158 = vlaneseq
    %v159 = vshrl.u32 %v158, 7
    %v160 = vsub.s32 %v157, %v159
    %v161 = vrot.slane %v151, %v160
    %v163 = vunpack.c.l.s4 1983009808
    %v164 = vunpack.c.0.s8 %v163
    %v165 = vlaneseq
    %v166 = vshrl.u32 %v165, 7
    %v167 = vsub.s32 %v164, %v166
    %v168 = vrot.slane %v152, %v167
    %v170 = vunpack.c.l.s4 1983009808
    %v171 = vunpack.c.0.s8 %v170
    %v172 = vlaneseq
    %v173 = vshrl.u32 %v172, 7
    %v174 = vsub.s32 %v171, %v173
    %v175 = vrot.slane %v153, %v174
    %v177 = vunpack.c.l.s4 1983009808
    %v178 = vunpack.c.0.s8 %v177
    %v179 = vlaneseq
    %v180 = vshrl.u32 %v179, 7
    %v181 = vsub.s32 %v178, %v180
    %v182 = vrot.slane %v154, %v181
    %v183 = vcombine.low %v161, %v175
    %v184 = vcombine.high %v161, %v175
    %v185 = vcombine.low %v168, %v182
    %v186 = vcombine.low %v91, %v93
    %v187 = vcombine.high %v91, %v93
    %v188 = vcombine.low %v95, %v97
    %v189 = vcombine.high %v95, %v97
    %v191 = vunpack.c.l.s4 1983009808
    %v192 = vunpack.c.0.s8 %v191
    %v193 = vlaneseq
    %v194 = vshrl.u32 %v193, 7
    %v195 = vsub.s32 %v192, %v194
    %v196 = vrot.slane %v186, %v195
    %v198 = vunpack.c.l.s4 1983009808
    %v199 = vunpack.c.0.s8 %v198
    %v200 = vlaneseq
    %v201 = vshrl.u32 %v200, 7
    %v202 = vsub.s32 %v199, %v201
    %v203 = vrot.slane %v187, %v202
    %v205 = vunpack.c.l.s4 1983009808
    %v206 = vunpack.c.0.s8 %v205
    %v207 = vlaneseq
    %v208 = vshrl.u32 %v207, 7
    %v209 = vsub.s32 %v206, %v208
    %v210 = vrot.slane %v188, %v209
    %v212 = vunpack.c.l.s4 1983009808
    %v213 = vunpack.c.0.s8 %v212
    %v214 = vlaneseq
    %v215 = vshrl.u32 %v214, 7
    %v216 = vsub.s32 %v213, %v215
    %v217 = vrot.slane %v189, %v216
    %v218 = vcombine.low %v196, %v210
    %v219 = vcombine.high %v196, %v210
    %v220 = vcombine.low %v203, %v217
    %v221 = vcombine.high %v203, %v217
    %v222 = vcombine.low %v92, %v94
    %v223 = vcombine.high %v92, %v94
    %v224 = vcombine.low %v96, %v98
    %v225 = vcombine.high %v96, %v98
    %v227 = vunpack.c.l.s4 1983009808
    %v228 = vunpack.c.0.s8 %v227
    %v229 = vlaneseq
    %v230 = vshrl.u32 %v229, 7
    %v231 = vsub.s32 %v228, %v230
    %v232 = vrot.slane %v222, %v231
    %v234 = vunpack.c.l.s4 1983009808
    %v235 = vunpack.c.0.s8 %v234
    %v236 = vlaneseq
    %v237 = vshrl.u32 %v236, 7
    %v238 = vsub.s32 %v235, %v237
    %v239 = vrot.slane %v223, %v238
    %v241 = vunpack.c.l.s4 1983009808
    %v242 = vunpack.c.0.s8 %v241
    %v243 = vlaneseq
    %v244 = vshrl.u32 %v243, 7
    %v245 = vsub.s32 %v242, %v244
    %v246 = vrot.slane %v224, %v245
    %v248 = vunpack.c.l.s4 1983009808
    %v249 = vunpack.c.0.s8 %v248
    %v250 = vlaneseq
    %v251 = vshrl.u32 %v250, 7
    %v252 = vsub.s32 %v249, %v251
    %v253 = vrot.slane %v225, %v252
    %v254 = vcombine.low %v232, %v246
    %v255 = vcombine.high %v232, %v246
    %v256 = vcombine.low %v239, %v253
    %v271 = vpack.c.bf16 %v218, %v147
    %v272 = vpack.c.bf16 %v219, %v148
    %v273 = vpack.c.bf16 %v220, %v149
    %v274 = vpack.c.bf16 %v221, %v150
    %v275 = vpack.c.bf16 %v254, %v183
    %v276 = vpack.c.bf16 %v255, %v184
    %v277 = vpack.c.bf16 %v256, %v185
    %v278 = vld [vmem:[#allocation5] sm:$0xff]
    %v279 = vld [vmem:[#allocation5 + $0x8] sm:$0xf]
    %v280 = vld [vmem:[#allocation5 + $0xc] sm:$0xff]
    %v281 = vld [vmem:[#allocation5 + $0x14] sm:$0xf]
    %v282 = vld [vmem:[#allocation5 + $0x18] sm:$0xff]
    %v283 = vld [vmem:[#allocation5 + $0x20] sm:$0xf]
    %v284 = vld [vmem:[#allocation5 + $0x24] sm:$0xff]
    %v285 = vld [vmem:[#allocation5 + $0x2c] sm:$0xf]
    %v286 = vld [vmem:[#allocation5 + $0x30] sm:$0xff]
    %v287 = vld [vmem:[#allocation5 + $0x38] sm:$0xf]
    %v288 = vld [vmem:[#allocation5 + $0x3c] sm:$0xff]
    %v289 = vld [vmem:[#allocation5 + $0x44] sm:$0xf]
    %v290 = vld [vmem:[#allocation5 + $0x48] sm:$0xff]
    %v291 = vld [vmem:[#allocation5 + $0x50] sm:$0xf]
    %v292 = vld [vmem:[#allocation5 + $0x54] sm:$0xff]
    %v293 = vld [vmem:[#allocation5 + $0x5c] sm:$0xf]
    %v294 = vld [vmem:[#allocation5 + $0x60] sm:$0xff]
    %v295 = vld [vmem:[#allocation5 + $0x68] sm:$0xf]
    %v296 = vld [vmem:[#allocation5 + $0x6c] sm:$0xff]
    %v297 = vld [vmem:[#allocation5 + $0x74] sm:$0xf]
    %v298 = vld [vmem:[#allocation5 + $0x78] sm:$0xff]
    %v299 = vld [vmem:[#allocation5 + $0x80] sm:$0xf]
    %v300 = vld [vmem:[#allocation5 + $0x84] sm:$0xff]
    %v301 = vld [vmem:[#allocation5 + $0x8c] sm:$0xf]
    %v302 = vld [vmem:[#allocation5 + $0x90] sm:$0xff]
    %v303 = vld [vmem:[#allocation5 + $0x98] sm:$0xf]
    %v304 = vld [vmem:[#allocation5 + $0x9c] sm:$0xff]
    %v305 = vld [vmem:[#allocation5 + $0xa4] sm:$0xf]
    %v306 = vld [vmem:[#allocation5 + $0xa8] sm:$0xff]
    %v307 = vld [vmem:[#allocation5 + $0xb0] sm:$0xf]
    %v308 = vld [vmem:[#allocation5 + $0xb4] sm:$0xff]
    %v309 = vld [vmem:[#allocation5 + $0xbc] sm:$0xf]
    %v310 = vld [vmem:[#allocation5 + $0xc0] sm:$0xff]
    %v311 = vld [vmem:[#allocation5 + $0xc8] sm:$0xf]
    %v312 = vld [vmem:[#allocation5 + $0xcc] sm:$0xff]
    %v313 = vld [vmem:[#allocation5 + $0xd4] sm:$0xf]
    %v314 = vld [vmem:[#allocation5 + $0xd8] sm:$0xff]
    %v315 = vld [vmem:[#allocation5 + $0xe0] sm:$0xf]
    %v316 = vld [vmem:[#allocation5 + $0xe4] sm:$0xff]
    %v317 = vld [vmem:[#allocation5 + $0xec] sm:$0xf]
    %v318 = vld [vmem:[#allocation5 + $0xf0] sm:$0xff]
    %v319 = vld [vmem:[#allocation5 + $0xf8] sm:$0xf]
    %v320 = vld [vmem:[#allocation5 + $0xfc] sm:$0xff]
    %v321 = vld [vmem:[#allocation5 + $0x104] sm:$0xf]
    %v322 = vld [vmem:[#allocation5 + $0x108] sm:$0xff]
    %v323 = vld [vmem:[#allocation5 + $0x110] sm:$0xf]
    %v324 = vld [vmem:[#allocation5 + $0x114] sm:$0xff]
    %v325 = vld [vmem:[#allocation5 + $0x11c] sm:$0xf]
    %v326 = vld [vmem:[#allocation5 + $0x120] sm:$0xff]
    %v327 = vld [vmem:[#allocation5 + $0x128] sm:$0xf]
    %v328 = vld [vmem:[#allocation5 + $0x12c] sm:$0xff]
    %v329 = vld [vmem:[#allocation5 + $0x134] sm:$0xf]
    %v330 = vld [vmem:[#allocation5 + $0x138] sm:$0xff]
    %v331 = vld [vmem:[#allocation5 + $0x140] sm:$0xf]
    %v332 = vld [vmem:[#allocation5 + $0x144] sm:$0xff]
    %v333 = vld [vmem:[#allocation5 + $0x14c] sm:$0xf]
    %v334 = vld [vmem:[#allocation5 + $0x150] sm:$0xff]
    %v335 = vld [vmem:[#allocation5 + $0x158] sm:$0xf]
    %v336 = vld [vmem:[#allocation5 + $0x15c] sm:$0xff]
    %v337 = vld [vmem:[#allocation5 + $0x164] sm:$0xf]
    %v338 = vld [vmem:[#allocation5 + $0x168] sm:$0xff]
    %v339 = vld [vmem:[#allocation5 + $0x170] sm:$0xf]
    %v340 = vld [vmem:[#allocation5 + $0x174] sm:$0xff]
    %v341 = vld [vmem:[#allocation5 + $0x17c] sm:$0xf]
    %v342 = vld [vmem:[#allocation5 + $0x180] sm:$0xff]
    %v343 = vld [vmem:[#allocation5 + $0x188] sm:$0xf]
    %v344 = vld [vmem:[#allocation5 + $0x18c] sm:$0xff]
    %v345 = vld [vmem:[#allocation5 + $0x194] sm:$0xf]
    %v346 = vld [vmem:[#allocation5 + $0x198] sm:$0xff]
    %v347 = vld [vmem:[#allocation5 + $0x1a0] sm:$0xf]
    %v348 = vld [vmem:[#allocation5 + $0x1a4] sm:$0xff]
    %v349 = vld [vmem:[#allocation5 + $0x1ac] sm:$0xf]
    %v350 = vld [vmem:[#allocation5 + $0x1b0] sm:$0xff]
    %v351 = vld [vmem:[#allocation5 + $0x1b8] sm:$0xf]
    %v352 = vld [vmem:[#allocation5 + $0x1bc] sm:$0xff]
    %v353 = vld [vmem:[#allocation5 + $0x1c4] sm:$0xf]
    %v354 = vld [vmem:[#allocation5 + $0x1c8] sm:$0xff]
    %v355 = vld [vmem:[#allocation5 + $0x1d0] sm:$0xf]
    %v356 = vld [vmem:[#allocation5 + $0x1d4] sm:$0xff]
    %v357 = vld [vmem:[#allocation5 + $0x1dc] sm:$0xf]
    %v358 = vld [vmem:[#allocation5 + $0x1e0] sm:$0xff]
    %v359 = vld [vmem:[#allocation5 + $0x1e8] sm:$0xf]
    %v360 = vld [vmem:[#allocation5 + $0x1ec] sm:$0xff]
    %v361 = vld [vmem:[#allocation5 + $0x1f4] sm:$0xf]
    %v362 = vld [vmem:[#allocation5 + $0x1f8] sm:$0xff]
    %v363 = vld [vmem:[#allocation5 + $0x200] sm:$0xf]
    %v364 = vld [vmem:[#allocation5 + $0x204] sm:$0xff]
    %v365 = vld [vmem:[#allocation5 + $0x20c] sm:$0xf]
    %v366 = vld [vmem:[#allocation5 + $0x210] sm:$0xff]
    %v367 = vld [vmem:[#allocation5 + $0x218] sm:$0xf]
    %v368 = vld [vmem:[#allocation5 + $0x21c] sm:$0xff]
    %v369 = vld [vmem:[#allocation5 + $0x224] sm:$0xf]
    %v370 = vld [vmem:[#allocation5 + $0x228] sm:$0xff]
    %v371 = vld [vmem:[#allocation5 + $0x230] sm:$0xf]
    %v372 = vld [vmem:[#allocation5 + $0x234] sm:$0xff]
    %v373 = vld [vmem:[#allocation5 + $0x23c] sm:$0xf]
    %v374 = vld [vmem:[#allocation5 + $0x240] sm:$0xff]
    %v375 = vld [vmem:[#allocation5 + $0x248] sm:$0xf]
    %v376 = vld [vmem:[#allocation5 + $0x24c] sm:$0xff]
    %v377 = vld [vmem:[#allocation5 + $0x254] sm:$0xf]
    %v378 = vld [vmem:[#allocation5 + $0x258] sm:$0xff]
    %v379 = vld [vmem:[#allocation5 + $0x260] sm:$0xf]
    %v380 = vld [vmem:[#allocation5 + $0x264] sm:$0xff]
    %v381 = vld [vmem:[#allocation5 + $0x26c] sm:$0xf]
    %v382 = vld [vmem:[#allocation5 + $0x270] sm:$0xff]
    %v383 = vld [vmem:[#allocation5 + $0x278] sm:$0xf]
    %v384 = vld [vmem:[#allocation5 + $0x27c] sm:$0xff]
    %v385 = vld [vmem:[#allocation5 + $0x284] sm:$0xf]
    %v386 = vld [vmem:[#allocation5 + $0x288] sm:$0xff]
    %v387 = vld [vmem:[#allocation5 + $0x290] sm:$0xf]
    %v388 = vld [vmem:[#allocation5 + $0x294] sm:$0xff]
    %v389 = vld [vmem:[#allocation5 + $0x29c] sm:$0xf]
    %v390 = vld [vmem:[#allocation5 + $0x2a0] sm:$0xff]
    %v391 = vld [vmem:[#allocation5 + $0x2a8] sm:$0xf]
    %v392 = vld [vmem:[#allocation5 + $0x2ac] sm:$0xff]
    %v393 = vld [vmem:[#allocation5 + $0x2b4] sm:$0xf]
    %v394 = vld [vmem:[#allocation5 + $0x2b8] sm:$0xff]
    %v395 = vld [vmem:[#allocation5 + $0x2c0] sm:$0xf]
    %v396 = vld [vmem:[#allocation5 + $0x2c4] sm:$0xff]
    %v397 = vld [vmem:[#allocation5 + $0x2cc] sm:$0xf]
    %v398 = vld [vmem:[#allocation5 + $0x2d0] sm:$0xff]
    %v399 = vld [vmem:[#allocation5 + $0x2d8] sm:$0xf]
    %v400 = vld [vmem:[#allocation5 + $0x2dc] sm:$0xff]
    %v401 = vld [vmem:[#allocation5 + $0x2e4] sm:$0xf]
    %v402 = vld [vmem:[#allocation5 + $0x2e8] sm:$0xff]
    %v403 = vld [vmem:[#allocation5 + $0x2f0] sm:$0xf]
    %v404 = vld [vmem:[#allocation5 + $0x2f4] sm:$0xff]
    %v405 = vld [vmem:[#allocation5 + $0x2fc] sm:$0xf]
    %v406 = vld [vmem:[#allocation5 + $0x300] sm:$0xff]
    %v407 = vld [vmem:[#allocation5 + $0x308] sm:$0xf]
    %v408 = vld [vmem:[#allocation5 + $0x30c] sm:$0xff]
    %v409 = vld [vmem:[#allocation5 + $0x314] sm:$0xf]
    %v410 = vld [vmem:[#allocation5 + $0x318] sm:$0xff]
    %v411 = vld [vmem:[#allocation5 + $0x320] sm:$0xf]
    %v412 = vld [vmem:[#allocation5 + $0x324] sm:$0xff]
    %v413 = vld [vmem:[#allocation5 + $0x32c] sm:$0xf]
    %v414 = vld [vmem:[#allocation5 + $0x330] sm:$0xff]
    %v415 = vld [vmem:[#allocation5 + $0x338] sm:$0xf]
    %v416 = vld [vmem:[#allocation5 + $0x33c] sm:$0xff]
    %v417 = vld [vmem:[#allocation5 + $0x344] sm:$0xf]
    %v418 = vld [vmem:[#allocation5 + $0x348] sm:$0xff]
    %v419 = vld [vmem:[#allocation5 + $0x350] sm:$0xf]
    %v420 = vld [vmem:[#allocation5 + $0x354] sm:$0xff]
    %v421 = vld [vmem:[#allocation5 + $0x35c] sm:$0xf]
    %v422 = vld [vmem:[#allocation5 + $0x360] sm:$0xff]
    %v423 = vld [vmem:[#allocation5 + $0x368] sm:$0xf]
    %v424 = vld [vmem:[#allocation5 + $0x36c] sm:$0xff]
    %v425 = vld [vmem:[#allocation5 + $0x374] sm:$0xf]
    %v426 = vld [vmem:[#allocation5 + $0x378] sm:$0xff]
    %v427 = vld [vmem:[#allocation5 + $0x380] sm:$0xf]
    %v428 = vld [vmem:[#allocation5 + $0x384] sm:$0xff]
    %v429 = vld [vmem:[#allocation5 + $0x38c] sm:$0xf]
    %v430 = vld [vmem:[#allocation5 + $0x390] sm:$0xff]
    %v431 = vld [vmem:[#allocation5 + $0x398] sm:$0xf]
    %v432 = vld [vmem:[#allocation5 + $0x39c] sm:$0xff]
    %v433 = vld [vmem:[#allocation5 + $0x3a4] sm:$0xf]
    %v434 = vld [vmem:[#allocation5 + $0x3a8] sm:$0xff]
    %v435 = vld [vmem:[#allocation5 + $0x3b0] sm:$0xf]
    %v436 = vld [vmem:[#allocation5 + $0x3b4] sm:$0xff]
    %v437 = vld [vmem:[#allocation5 + $0x3bc] sm:$0xf]
    %v438 = vld [vmem:[#allocation5 + $0x3c0] sm:$0xff]
    %v439 = vld [vmem:[#allocation5 + $0x3c8] sm:$0xf]
    %v440 = vld [vmem:[#allocation5 + $0x3cc] sm:$0xff]
    %v441 = vld [vmem:[#allocation5 + $0x3d4] sm:$0xf]
    %v442 = vld [vmem:[#allocation5 + $0x3d8] sm:$0xff]
    %v443 = vld [vmem:[#allocation5 + $0x3e0] sm:$0xf]
    %v444 = vld [vmem:[#allocation5 + $0x3e4] sm:$0xff]
    %v445 = vld [vmem:[#allocation5 + $0x3ec] sm:$0xf]
    %v446 = vld [vmem:[#allocation5 + $0x3f0] sm:$0xff]
    %v447 = vld [vmem:[#allocation5 + $0x3f8] sm:$0xf]
    %v448 = vld [vmem:[#allocation5 + $0x3fc] sm:$0xff]
    %v449 = vld [vmem:[#allocation5 + $0x404] sm:$0xf]
    %v450 = vld [vmem:[#allocation5 + $0x408] sm:$0xff]
    %v451 = vld [vmem:[#allocation5 + $0x410] sm:$0xf]
    %v452 = vld [vmem:[#allocation5 + $0x414] sm:$0xff]
    %v453 = vld [vmem:[#allocation5 + $0x41c] sm:$0xf]
    %v454 = vld [vmem:[#allocation5 + $0x420] sm:$0xff]
    %v455 = vld [vmem:[#allocation5 + $0x428] sm:$0xf]
    %v456 = vld [vmem:[#allocation5 + $0x42c] sm:$0xff]
    %v457 = vld [vmem:[#allocation5 + $0x434] sm:$0xf]
    %v458 = vld [vmem:[#allocation5 + $0x438] sm:$0xff]
    %v459 = vld [vmem:[#allocation5 + $0x440] sm:$0xf]
    %v460 = vld [vmem:[#allocation5 + $0x444] sm:$0xff]
    %v461 = vld [vmem:[#allocation5 + $0x44c] sm:$0xf]
    %v462 = vld [vmem:[#allocation5 + $0x450] sm:$0xff]
    %v463 = vld [vmem:[#allocation5 + $0x458] sm:$0xf]
    %v464 = vld [vmem:[#allocation5 + $0x45c] sm:$0xff]
    %v465 = vld [vmem:[#allocation5 + $0x464] sm:$0xf]
    %v466 = vld [vmem:[#allocation5 + $0x468] sm:$0xff]
    %v467 = vld [vmem:[#allocation5 + $0x470] sm:$0xf]
    %v468 = vld [vmem:[#allocation5 + $0x474] sm:$0xff]
    %v469 = vld [vmem:[#allocation5 + $0x47c] sm:$0xf]
    %v470 = vld [vmem:[#allocation5 + $0x480] sm:$0xff]
    %v471 = vld [vmem:[#allocation5 + $0x488] sm:$0xf]
    %v472 = vld [vmem:[#allocation5 + $0x48c] sm:$0xff]
    %v473 = vld [vmem:[#allocation5 + $0x494] sm:$0xf]
    %v474 = vld [vmem:[%s2] sm:$0x7]
    %v476 = vlaneseq
    %v477 = vshrl.u32 %v476, 7
    %v478 = vsub.s32 0, %v477
    %v479 = vrot.slane %v474, %v478
    %v480 = vlaneseq
    %v481 = vshrl.u32 %v480, 7
    %v482 = vsub.s32 1, %v481
    %v483 = vrot.slane %v474, %v482
    %v484 = vlaneseq
    %v485 = vshrl.u32 %v484, 7
    %v486 = vsub.s32 2, %v485
    %v487 = vrot.slane %v474, %v486
    %v687 = vunpack.c.l.b16 %v278
    %v688 = vunpack.c.h.b16 %v278
    %v689 = vunpack.c.l.b16 %v279
    %v690 = vunpack.c.l.b16 %v280
    %v691 = vunpack.c.h.b16 %v280
    %v692 = vunpack.c.l.b16 %v281
    %v693 = vunpack.c.l.b16 %v282
    %v694 = vunpack.c.h.b16 %v282
    %v695 = vunpack.c.l.b16 %v283
    %v696 = vunpack.c.l.b16 %v284
    %v697 = vunpack.c.h.b16 %v284
    %v698 = vunpack.c.l.b16 %v285
    %v699 = vunpack.c.l.b16 %v286
    %v700 = vunpack.c.h.b16 %v286
    %v701 = vunpack.c.l.b16 %v287
    %v702 = vunpack.c.l.b16 %v288
    %v703 = vunpack.c.h.b16 %v288
    %v704 = vunpack.c.l.b16 %v289
    %v705 = vunpack.c.l.b16 %v290
    %v706 = vunpack.c.h.b16 %v290
    %v707 = vunpack.c.l.b16 %v291
    %v708 = vunpack.c.l.b16 %v292
    %v709 = vunpack.c.h.b16 %v292
    %v710 = vunpack.c.l.b16 %v293
    %v711 = vunpack.c.l.b16 %v294
    %v712 = vunpack.c.h.b16 %v294
    %v713 = vunpack.c.l.b16 %v295
    %v714 = vunpack.c.l.b16 %v296
    %v715 = vunpack.c.h.b16 %v296
    %v716 = vunpack.c.l.b16 %v297
    %v717 = vunpack.c.l.b16 %v298
    %v718 = vunpack.c.h.b16 %v298
    %v719 = vunpack.c.l.b16 %v299
    %v720 = vunpack.c.l.b16 %v300
    %v721 = vunpack.c.h.b16 %v300
    %v722 = vunpack.c.l.b16 %v301
    %v723 = vunpack.c.l.b16 %v302
    %v724 = vunpack.c.h.b16 %v302
    %v725 = vunpack.c.l.b16 %v303
    %v726 = vunpack.c.l.b16 %v304
    %v727 = vunpack.c.h.b16 %v304
    %v728 = vunpack.c.l.b16 %v305
    %v729 = vunpack.c.l.b16 %v306
    %v730 = vunpack.c.h.b16 %v306
    %v731 = vunpack.c.l.b16 %v307
    %v732 = vunpack.c.l.b16 %v308
    %v733 = vunpack.c.h.b16 %v308
    %v734 = vunpack.c.l.b16 %v309
    %v735 = vunpack.c.l.b16 %v310
    %v736 = vunpack.c.h.b16 %v310
    %v737 = vunpack.c.l.b16 %v311
    %v738 = vunpack.c.l.b16 %v312
    %v739 = vunpack.c.h.b16 %v312
    %v740 = vunpack.c.l.b16 %v313
    %v741 = vunpack.c.l.b16 %v314
    %v742 = vunpack.c.h.b16 %v314
    %v743 = vunpack.c.l.b16 %v315
    %v744 = vunpack.c.l.b16 %v316
    %v745 = vunpack.c.h.b16 %v316
    %v746 = vunpack.c.l.b16 %v317
    %v747 = vunpack.c.l.b16 %v318
    %v748 = vunpack.c.h.b16 %v318
    %v749 = vunpack.c.l.b16 %v319
    %v750 = vunpack.c.l.b16 %v320
    %v751 = vunpack.c.h.b16 %v320
    %v752 = vunpack.c.l.b16 %v321
    %v753 = vunpack.c.l.b16 %v322
    %v754 = vunpack.c.h.b16 %v322
    %v755 = vunpack.c.l.b16 %v323
    %v756 = vunpack.c.l.b16 %v324
    %v757 = vunpack.c.h.b16 %v324
    %v758 = vunpack.c.l.b16 %v325
    %v759 = vunpack.c.l.b16 %v326
    %v760 = vunpack.c.h.b16 %v326
    %v761 = vunpack.c.l.b16 %v327
    %v762 = vunpack.c.l.b16 %v328
    %v763 = vunpack.c.h.b16 %v328
    %v764 = vunpack.c.l.b16 %v329
    %v765 = vunpack.c.l.b16 %v330
    %v766 = vunpack.c.h.b16 %v330
    %v767 = vunpack.c.l.b16 %v331
    %v768 = vunpack.c.l.b16 %v332
    %v769 = vunpack.c.h.b16 %v332
    %v770 = vunpack.c.l.b16 %v333
    %v771 = vunpack.c.l.b16 %v334
    %v772 = vunpack.c.h.b16 %v334
    %v773 = vunpack.c.l.b16 %v335
    %v774 = vunpack.c.l.b16 %v336
    %v775 = vunpack.c.h.b16 %v336
    %v776 = vunpack.c.l.b16 %v337
    %v777 = vunpack.c.l.b16 %v338
    %v778 = vunpack.c.h.b16 %v338
    %v779 = vunpack.c.l.b16 %v339
    %v780 = vunpack.c.l.b16 %v340
    %v781 = vunpack.c.h.b16 %v340
    %v782 = vunpack.c.l.b16 %v341
    %v783 = vunpack.c.l.b16 %v342
    %v784 = vunpack.c.h.b16 %v342
    %v785 = vunpack.c.l.b16 %v343
    %v786 = vunpack.c.l.b16 %v344
    %v787 = vunpack.c.h.b16 %v344
    %v788 = vunpack.c.l.b16 %v345
    %v789 = vunpack.c.l.b16 %v346
    %v790 = vunpack.c.h.b16 %v346
    %v791 = vunpack.c.l.b16 %v347
    %v792 = vunpack.c.l.b16 %v348
    %v793 = vunpack.c.h.b16 %v348
    %v794 = vunpack.c.l.b16 %v349
    %v795 = vunpack.c.l.b16 %v350
    %v796 = vunpack.c.h.b16 %v350
    %v797 = vunpack.c.l.b16 %v351
    %v798 = vunpack.c.l.b16 %v352
    %v799 = vunpack.c.h.b16 %v352
    %v800 = vunpack.c.l.b16 %v353
    %v801 = vunpack.c.l.b16 %v354
    %v802 = vunpack.c.h.b16 %v354
    %v803 = vunpack.c.l.b16 %v355
    %v804 = vunpack.c.l.b16 %v356
    %v805 = vunpack.c.h.b16 %v356
    %v806 = vunpack.c.l.b16 %v357
    %v807 = vunpack.c.l.b16 %v358
    %v808 = vunpack.c.h.b16 %v358
    %v809 = vunpack.c.l.b16 %v359
    %v810 = vunpack.c.l.b16 %v360
    %v811 = vunpack.c.h.b16 %v360
    %v812 = vunpack.c.l.b16 %v361
    %v813 = vunpack.c.l.b16 %v362
    %v814 = vunpack.c.h.b16 %v362
    %v815 = vunpack.c.l.b16 %v363
    %v816 = vunpack.c.l.b16 %v364
    %v817 = vunpack.c.h.b16 %v364
    %v818 = vunpack.c.l.b16 %v365
    %v819 = vunpack.c.l.b16 %v366
    %v820 = vunpack.c.h.b16 %v366
    %v821 = vunpack.c.l.b16 %v367
    %v822 = vunpack.c.l.b16 %v368
    %v823 = vunpack.c.h.b16 %v368
    %v824 = vunpack.c.l.b16 %v369
    %v825 = vunpack.c.l.b16 %v370
    %v826 = vunpack.c.h.b16 %v370
    %v827 = vunpack.c.l.b16 %v371
    %v828 = vunpack.c.l.b16 %v372
    %v829 = vunpack.c.h.b16 %v372
    %v830 = vunpack.c.l.b16 %v373
    %v831 = vunpack.c.l.b16 %v374
    %v832 = vunpack.c.h.b16 %v374
    %v833 = vunpack.c.l.b16 %v375
    %v834 = vunpack.c.l.b16 %v376
    %v835 = vunpack.c.h.b16 %v376
    %v836 = vunpack.c.l.b16 %v377
    %v837 = vunpack.c.l.b16 %v378
    %v838 = vunpack.c.h.b16 %v378
    %v839 = vunpack.c.l.b16 %v379
    %v840 = vunpack.c.l.b16 %v380
    %v841 = vunpack.c.h.b16 %v380
    %v842 = vunpack.c.l.b16 %v381
    %v843 = vunpack.c.l.b16 %v382
    %v844 = vunpack.c.h.b16 %v382
    %v845 = vunpack.c.l.b16 %v383
    %v846 = vunpack.c.l.b16 %v384
    %v847 = vunpack.c.h.b16 %v384
    %v848 = vunpack.c.l.b16 %v385
    %v849 = vunpack.c.l.b16 %v386
    %v850 = vunpack.c.h.b16 %v386
    %v851 = vunpack.c.l.b16 %v387
    %v852 = vunpack.c.l.b16 %v388
    %v853 = vunpack.c.h.b16 %v388
    %v854 = vunpack.c.l.b16 %v389
    %v855 = vunpack.c.l.b16 %v390
    %v856 = vunpack.c.h.b16 %v390
    %v857 = vunpack.c.l.b16 %v391
    %v858 = vunpack.c.l.b16 %v392
    %v859 = vunpack.c.h.b16 %v392
    %v860 = vunpack.c.l.b16 %v393
    %v861 = vunpack.c.l.b16 %v394
    %v862 = vunpack.c.h.b16 %v394
    %v863 = vunpack.c.l.b16 %v395
    %v864 = vunpack.c.l.b16 %v396
    %v865 = vunpack.c.h.b16 %v396
    %v866 = vunpack.c.l.b16 %v397
    %v867 = vunpack.c.l.b16 %v398
    %v868 = vunpack.c.h.b16 %v398
    %v869 = vunpack.c.l.b16 %v399
    %v870 = vunpack.c.l.b16 %v400
    %v871 = vunpack.c.h.b16 %v400
    %v872 = vunpack.c.l.b16 %v401
    %v873 = vunpack.c.l.b16 %v402
    %v874 = vunpack.c.h.b16 %v402
    %v875 = vunpack.c.l.b16 %v403
    %v876 = vunpack.c.l.b16 %v404
    %v877 = vunpack.c.h.b16 %v404
    %v878 = vunpack.c.l.b16 %v405
    %v879 = vunpack.c.l.b16 %v406
    %v880 = vunpack.c.h.b16 %v406
    %v881 = vunpack.c.l.b16 %v407
    %v882 = vunpack.c.l.b16 %v408
    %v883 = vunpack.c.h.b16 %v408
    %v884 = vunpack.c.l.b16 %v409
    %v885 = vunpack.c.l.b16 %v410
    %v886 = vunpack.c.h.b16 %v410
    %v887 = vunpack.c.l.b16 %v411
    %v888 = vunpack.c.l.b16 %v412
    %v889 = vunpack.c.h.b16 %v412
    %v890 = vunpack.c.l.b16 %v413
    %v891 = vunpack.c.l.b16 %v414
    %v892 = vunpack.c.h.b16 %v414
    %v893 = vunpack.c.l.b16 %v415
    %v894 = vunpack.c.l.b16 %v416
    %v895 = vunpack.c.h.b16 %v416
    %v896 = vunpack.c.l.b16 %v417
    %v897 = vunpack.c.l.b16 %v418
    %v898 = vunpack.c.h.b16 %v418
    %v899 = vunpack.c.l.b16 %v419
    %v900 = vunpack.c.l.b16 %v420
    %v901 = vunpack.c.h.b16 %v420
    %v902 = vunpack.c.l.b16 %v421
    %v903 = vunpack.c.l.b16 %v422
    %v904 = vunpack.c.h.b16 %v422
    %v905 = vunpack.c.l.b16 %v423
    %v906 = vunpack.c.l.b16 %v424
    %v907 = vunpack.c.h.b16 %v424
    %v908 = vunpack.c.l.b16 %v425
    %v909 = vunpack.c.l.b16 %v426
    %v910 = vunpack.c.h.b16 %v426
    %v911 = vunpack.c.l.b16 %v427
    %v912 = vunpack.c.l.b16 %v428
    %v913 = vunpack.c.h.b16 %v428
    %v914 = vunpack.c.l.b16 %v429
    %v915 = vunpack.c.l.b16 %v430
    %v916 = vunpack.c.h.b16 %v430
    %v917 = vunpack.c.l.b16 %v431
    %v918 = vunpack.c.l.b16 %v432
    %v919 = vunpack.c.h.b16 %v432
    %v920 = vunpack.c.l.b16 %v433
    %v921 = vunpack.c.l.b16 %v434
    %v922 = vunpack.c.h.b16 %v434
    %v923 = vunpack.c.l.b16 %v435
    %v924 = vunpack.c.l.b16 %v436
    %v925 = vunpack.c.h.b16 %v436
    %v926 = vunpack.c.l.b16 %v437
    %v927 = vunpack.c.l.b16 %v438
    %v928 = vunpack.c.h.b16 %v438
    %v929 = vunpack.c.l.b16 %v439
    %v930 = vunpack.c.l.b16 %v440
    %v931 = vunpack.c.h.b16 %v440
    %v932 = vunpack.c.l.b16 %v441
    %v933 = vunpack.c.l.b16 %v442
    %v934 = vunpack.c.h.b16 %v442
    %v935 = vunpack.c.l.b16 %v443
    %v936 = vunpack.c.l.b16 %v444
    %v937 = vunpack.c.h.b16 %v444
    %v938 = vunpack.c.l.b16 %v445
    %v939 = vunpack.c.l.b16 %v446
    %v940 = vunpack.c.h.b16 %v446
    %v941 = vunpack.c.l.b16 %v447
    %v942 = vunpack.c.l.b16 %v448
    %v943 = vunpack.c.h.b16 %v448
    %v944 = vunpack.c.l.b16 %v449
    %v945 = vunpack.c.l.b16 %v450
    %v946 = vunpack.c.h.b16 %v450
    %v947 = vunpack.c.l.b16 %v451
    %v948 = vunpack.c.l.b16 %v452
    %v949 = vunpack.c.h.b16 %v452
    %v950 = vunpack.c.l.b16 %v453
    %v951 = vunpack.c.l.b16 %v454
    %v952 = vunpack.c.h.b16 %v454
    %v953 = vunpack.c.l.b16 %v455
    %v954 = vunpack.c.l.b16 %v456
    %v955 = vunpack.c.h.b16 %v456
    %v956 = vunpack.c.l.b16 %v457
    %v957 = vunpack.c.l.b16 %v458
    %v958 = vunpack.c.h.b16 %v458
    %v959 = vunpack.c.l.b16 %v459
    %v960 = vunpack.c.l.b16 %v460
    %v961 = vunpack.c.h.b16 %v460
    %v962 = vunpack.c.l.b16 %v461
    %v963 = vunpack.c.l.b16 %v462
    %v964 = vunpack.c.h.b16 %v462
    %v965 = vunpack.c.l.b16 %v463
    %v966 = vunpack.c.l.b16 %v464
    %v967 = vunpack.c.h.b16 %v464
    %v968 = vunpack.c.l.b16 %v465
    %v969 = vunpack.c.l.b16 %v466
    %v970 = vunpack.c.h.b16 %v466
    %v971 = vunpack.c.l.b16 %v467
    %v972 = vunpack.c.l.b16 %v468
    %v973 = vunpack.c.h.b16 %v468
    %v974 = vunpack.c.l.b16 %v469
    %v975 = vunpack.c.l.b16 %v470
    %v976 = vunpack.c.h.b16 %v470
    %v977 = vunpack.c.l.b16 %v471
    %v978 = vunpack.c.l.b16 %v472
    %v979 = vunpack.c.h.b16 %v472
    %v980 = vunpack.c.l.b16 %v473
    %v981 = vpack.c.b16 %v690, %v687
    %v982 = vpack.c.b16 %v691, %v688
    %v983 = vpack.c.b16 %v692, %v689
    %v984 = vpack.c.b16 %v696, %v693
    %v985 = vpack.c.b16 %v697, %v694
    %v986 = vpack.c.b16 %v698, %v695
    %v987 = vpack.c.b16 %v702, %v699
    %v988 = vpack.c.b16 %v703, %v700
    %v989 = vpack.c.b16 %v704, %v701
    %v990 = vpack.c.b16 %v708, %v705
    %v991 = vpack.c.b16 %v709, %v706
    %v992 = vpack.c.b16 %v710, %v707
    %v993 = vpack.c.b16 %v714, %v711
    %v994 = vpack.c.b16 %v715, %v712
    %v995 = vpack.c.b16 %v716, %v713
    %v996 = vpack.c.b16 %v720, %v717
    %v997 = vpack.c.b16 %v721, %v718
    %v998 = vpack.c.b16 %v722, %v719
    %v999 = vpack.c.b16 %v726, %v723
    %v1000 = vpack.c.b16 %v727, %v724
    %v1001 = vpack.c.b16 %v728, %v725
    %v1002 = vpack.c.b16 %v732, %v729
    %v1003 = vpack.c.b16 %v733, %v730
    %v1004 = vpack.c.b16 %v734, %v731
    %v1005 = vpack.c.b16 %v738, %v735
    %v1006 = vpack.c.b16 %v739, %v736
    %v1007 = vpack.c.b16 %v740, %v737
    %v1008 = vpack.c.b16 %v744, %v741
    %v1009 = vpack.c.b16 %v745, %v742
    %v1010 = vpack.c.b16 %v746, %v743
    %v1011 = vpack.c.b16 %v750, %v747
    %v1012 = vpack.c.b16 %v751, %v748
    %v1013 = vpack.c.b16 %v752, %v749
    %v1014 = vpack.c.b16 %v756, %v753
    %v1015 = vpack.c.b16 %v757, %v754
    %v1016 = vpack.c.b16 %v758, %v755
    %v1017 = vpack.c.b16 %v762, %v759
    %v1018 = vpack.c.b16 %v763, %v760
    %v1019 = vpack.c.b16 %v764, %v761
    %v1020 = vpack.c.b16 %v768, %v765
    %v1021 = vpack.c.b16 %v769, %v766
    %v1022 = vpack.c.b16 %v770, %v767
    %v1023 = vpack.c.b16 %v774, %v771
    %v1024 = vpack.c.b16 %v775, %v772
    %v1025 = vpack.c.b16 %v776, %v773
    %v1026 = vpack.c.b16 %v780, %v777
    %v1027 = vpack.c.b16 %v781, %v778
    %v1028 = vpack.c.b16 %v782, %v779
    %v1029 = vpack.c.b16 %v786, %v783
    %v1030 = vpack.c.b16 %v787, %v784
    %v1031 = vpack.c.b16 %v788, %v785
    %v1032 = vpack.c.b16 %v792, %v789
    %v1033 = vpack.c.b16 %v793, %v790
    %v1034 = vpack.c.b16 %v794, %v791
    %v1035 = vpack.c.b16 %v798, %v795
    %v1036 = vpack.c.b16 %v799, %v796
    %v1037 = vpack.c.b16 %v800, %v797
    %v1038 = vpack.c.b16 %v804, %v801
    %v1039 = vpack.c.b16 %v805, %v802
    %v1040 = vpack.c.b16 %v806, %v803
    %v1041 = vpack.c.b16 %v810, %v807
    %v1042 = vpack.c.b16 %v811, %v808
    %v1043 = vpack.c.b16 %v812, %v809
    %v1044 = vpack.c.b16 %v816, %v813
    %v1045 = vpack.c.b16 %v817, %v814
    %v1046 = vpack.c.b16 %v818, %v815
    %v1047 = vpack.c.b16 %v822, %v819
    %v1048 = vpack.c.b16 %v823, %v820
    %v1049 = vpack.c.b16 %v824, %v821
    %v1050 = vpack.c.b16 %v828, %v825
    %v1051 = vpack.c.b16 %v829, %v826
    %v1052 = vpack.c.b16 %v830, %v827
    %v1053 = vpack.c.b16 %v834, %v831
    %v1054 = vpack.c.b16 %v835, %v832
    %v1055 = vpack.c.b16 %v836, %v833
    %v1056 = vpack.c.b16 %v840, %v837
    %v1057 = vpack.c.b16 %v841, %v838
    %v1058 = vpack.c.b16 %v842, %v839
    %v1059 = vpack.c.b16 %v846, %v843
    %v1060 = vpack.c.b16 %v847, %v844
    %v1061 = vpack.c.b16 %v848, %v845
    %v1062 = vpack.c.b16 %v852, %v849
    %v1063 = vpack.c.b16 %v853, %v850
    %v1064 = vpack.c.b16 %v854, %v851
    %v1065 = vpack.c.b16 %v858, %v855
    %v1066 = vpack.c.b16 %v859, %v856
    %v1067 = vpack.c.b16 %v860, %v857
    %v1068 = vpack.c.b16 %v864, %v861
    %v1069 = vpack.c.b16 %v865, %v862
    %v1070 = vpack.c.b16 %v866, %v863
    %v1071 = vpack.c.b16 %v870, %v867
    %v1072 = vpack.c.b16 %v871, %v868
    %v1073 = vpack.c.b16 %v872, %v869
    %v1074 = vpack.c.b16 %v876, %v873
    %v1075 = vpack.c.b16 %v877, %v874
    %v1076 = vpack.c.b16 %v878, %v875
    %v1077 = vpack.c.b16 %v882, %v879
    %v1078 = vpack.c.b16 %v883, %v880
    %v1079 = vpack.c.b16 %v884, %v881
    %v1080 = vpack.c.b16 %v888, %v885
    %v1081 = vpack.c.b16 %v889, %v886
    %v1082 = vpack.c.b16 %v890, %v887
    %v1083 = vpack.c.b16 %v894, %v891
    %v1084 = vpack.c.b16 %v895, %v892
    %v1085 = vpack.c.b16 %v896, %v893
    %v1086 = vpack.c.b16 %v900, %v897
    %v1087 = vpack.c.b16 %v901, %v898
    %v1088 = vpack.c.b16 %v902, %v899
    %v1089 = vpack.c.b16 %v906, %v903
    %v1090 = vpack.c.b16 %v907, %v904
    %v1091 = vpack.c.b16 %v908, %v905
    %v1092 = vpack.c.b16 %v912, %v909
    %v1093 = vpack.c.b16 %v913, %v910
    %v1094 = vpack.c.b16 %v914, %v911
    %v1095 = vpack.c.b16 %v918, %v915
    %v1096 = vpack.c.b16 %v919, %v916
    %v1097 = vpack.c.b16 %v920, %v917
    %v1098 = vpack.c.b16 %v924, %v921
    %v1099 = vpack.c.b16 %v925, %v922
    %v1100 = vpack.c.b16 %v926, %v923
    %v1101 = vpack.c.b16 %v930, %v927
    %v1102 = vpack.c.b16 %v931, %v928
    %v1103 = vpack.c.b16 %v932, %v929
    %v1104 = vpack.c.b16 %v936, %v933
    %v1105 = vpack.c.b16 %v937, %v934
    %v1106 = vpack.c.b16 %v938, %v935
    %v1107 = vpack.c.b16 %v942, %v939
    %v1108 = vpack.c.b16 %v943, %v940
    %v1109 = vpack.c.b16 %v944, %v941
    %v1110 = vpack.c.b16 %v948, %v945
    %v1111 = vpack.c.b16 %v949, %v946
    %v1112 = vpack.c.b16 %v950, %v947
    %v1113 = vpack.c.b16 %v954, %v951
    %v1114 = vpack.c.b16 %v955, %v952
    %v1115 = vpack.c.b16 %v956, %v953
    %v1116 = vpack.c.b16 %v960, %v957
    %v1117 = vpack.c.b16 %v961, %v958
    %v1118 = vpack.c.b16 %v962, %v959
    %v1119 = vpack.c.b16 %v966, %v963
    %v1120 = vpack.c.b16 %v967, %v964
    %v1121 = vpack.c.b16 %v968, %v965
    %v1122 = vpack.c.b16 %v972, %v969
    %v1123 = vpack.c.b16 %v973, %v970
    %v1124 = vpack.c.b16 %v974, %v971
    %v1125 = vpack.c.b16 %v978, %v975
    %v1126 = vpack.c.b16 %v979, %v976
    %v1127 = vpack.c.b16 %v980, %v977
    %vm1275 = vcmask 130048
    %v1277 = vsel %vm1275, %v277, 0
    %1279 = vmatprep.subr.bf16.mxu0 %v982
    %1280 = vmatpush1.bf16.msra.mxu0 %v981
    %1281 = vmatprep.subr.bf16.mxu0 %v985
    %1282 = vmatpush1.bf16.msra.mxu0 %v984
    %1283 = vmatprep.subr.bf16.mxu0 %v988
    %1284 = vmatpush1.bf16.msra.mxu0 %v987
    %1285 = vmatprep.subr.bf16.mxu0 %v991
    %1286 = vmatpush1.bf16.msra.mxu0 %v990
    %1287 = vmatprep.subr.bf16.mxu0 %v994
    %1288 = vmatpush1.bf16.msra.mxu0 %v993
    %1289 = vmatprep.subr.bf16.mxu0 %v997
    %1290 = vmatpush1.bf16.msra.mxu0 %v996
    %1291 = vmatprep.subr.bf16.mxu0 %v1000
    %1292 = vmatpush1.bf16.msra.mxu0 %v999
    %1293 = vmatprep.subr.bf16.mxu0 %v1003
    %1294 = vmatpush1.bf16.msra.mxu0 %v1002
    %1295 = vmatprep.subr.bf16.mxu0 %v1006
    %1296 = vmatpush1.bf16.msra.mxu0 %v1005
    %1297 = vmatprep.subr.bf16.mxu0 %v1009
    %1298 = vmatpush1.bf16.msra.mxu0 %v1008
    %1299 = vmatprep.subr.bf16.mxu0 %v1012
    %1300 = vmatpush1.bf16.msra.mxu0 %v1011
    %1301 = vmatprep.subr.bf16.mxu0 %v1015
    %1302 = vmatpush1.bf16.msra.mxu0 %v1014
    %1303 = vmatprep.subr.bf16.mxu0 %v1018
    %1304 = vmatpush1.bf16.msra.mxu0 %v1017
    %1305 = vmatprep.subr.bf16.mxu0 %v1021
    %1306 = vmatpush1.bf16.msra.mxu0 %v1020
    %1307 = vmatprep.subr.bf16.mxu0 %v1024
    %1308 = vmatpush1.bf16.msra.mxu0 %v1023
    %1309 = vmatprep.subr.bf16.mxu0 %v1027
    %1310 = vmatpush1.bf16.msra.mxu0 %v1026
    %1311 = vmatprep.mubr.bf16.mxu0 %v272
    %1312 = vmatmul.mubr.bf16.gmra.mrb[0].mxu0 %v271
    %v1313 = vpop.f32.mrb[0].mxu0
    %v1314 = vadd.f32 %v479, %v1313
    %v1315 = vpop.f32.mrb[0].mxu0
    %v1316 = vadd.f32 %v483, %v1315
    %v1317 = vpop.f32.mrb[0].mxu0
    %v1318 = vadd.f32 %v479, %v1317
    %v1319 = vpop.f32.mrb[0].mxu0
    %v1320 = vadd.f32 %v483, %v1319
    %1321 = vdwg.mxu0
    %1322 = vmatprep.subr.bf16.mxu0 %v1030
    %1323 = vmatpush1.bf16.msra.mxu0 %v1029
    %1324 = vmatprep.subr.bf16.mxu0 %v1033
    %1325 = vmatpush1.bf16.msra.mxu0 %v1032
    %1326 = vmatprep.subr.bf16.mxu0 %v1036
    %1327 = vmatpush1.bf16.msra.mxu0 %v1035
    %1328 = vmatprep.subr.bf16.mxu0 %v1039
    %1329 = vmatpush1.bf16.msra.mxu0 %v1038
    %1330 = vmatprep.subr.bf16.mxu0 %v1042
    %1331 = vmatpush1.bf16.msra.mxu0 %v1041
    %1332 = vmatprep.subr.bf16.mxu0 %v1045
    %1333 = vmatpush1.bf16.msra.mxu0 %v1044
    %1334 = vmatprep.subr.bf16.mxu0 %v1048
    %1335 = vmatpush1.bf16.msra.mxu0 %v1047
    %1336 = vmatprep.subr.bf16.mxu0 %v1051
    %1337 = vmatpush1.bf16.msra.mxu0 %v1050
    %1338 = vmatprep.subr.bf16.mxu0 %v1054
    %1339 = vmatpush1.bf16.msra.mxu0 %v1053
    %1340 = vmatprep.subr.bf16.mxu0 %v1057
    %1341 = vmatpush1.bf16.msra.mxu0 %v1056
    %1342 = vmatprep.subr.bf16.mxu0 %v1060
    %1343 = vmatpush1.bf16.msra.mxu0 %v1059
    %1344 = vmatprep.subr.bf16.mxu0 %v1063
    %1345 = vmatpush1.bf16.msra.mxu0 %v1062
    %1346 = vmatprep.subr.bf16.mxu0 %v1066
    %1347 = vmatpush1.bf16.msra.mxu0 %v1065
    %1348 = vmatprep.subr.bf16.mxu0 %v1069
    %1349 = vmatpush1.bf16.msra.mxu0 %v1068
    %1350 = vmatprep.subr.bf16.mxu0 %v1072
    %1351 = vmatpush1.bf16.msra.mxu0 %v1071
    %1352 = vmatprep.subr.bf16.mxu0 %v1075
    %1353 = vmatpush1.bf16.msra.mxu0 %v1074
    %1354 = vmatprep.mubr.bf16.mxu0 %v274
    %1355 = vmatmul.mubr.bf16.gmra.mrb[0].mxu0 %v273
    %v1356 = vpop.f32.mrb[0].mxu0
    %v1357 = vadd.f32 %v1314, %v1356
    %v1358 = vpop.f32.mrb[0].mxu0
    %v1359 = vadd.f32 %v1316, %v1358
    %v1360 = vpop.f32.mrb[0].mxu0
    %v1361 = vadd.f32 %v1318, %v1360
    %v1362 = vpop.f32.mrb[0].mxu0
    %v1363 = vadd.f32 %v1320, %v1362
    %1364 = vdwg.mxu0
    %1365 = vmatprep.subr.bf16.mxu0 %v1078
    %1366 = vmatpush1.bf16.msra.mxu0 %v1077
    %1367 = vmatprep.subr.bf16.mxu0 %v1081
    %1368 = vmatpush1.bf16.msra.mxu0 %v1080
    %1369 = vmatprep.subr.bf16.mxu0 %v1084
    %1370 = vmatpush1.bf16.msra.mxu0 %v1083
    %1371 = vmatprep.subr.bf16.mxu0 %v1087
    %1372 = vmatpush1.bf16.msra.mxu0 %v1086
    %1373 = vmatprep.subr.bf16.mxu0 %v1090
    %1374 = vmatpush1.bf16.msra.mxu0 %v1089
    %1375 = vmatprep.subr.bf16.mxu0 %v1093
    %1376 = vmatpush1.bf16.msra.mxu0 %v1092
    %1377 = vmatprep.subr.bf16.mxu0 %v1096
    %1378 = vmatpush1.bf16.msra.mxu0 %v1095
    %1379 = vmatprep.subr.bf16.mxu0 %v1099
    %1380 = vmatpush1.bf16.msra.mxu0 %v1098
    %1381 = vmatprep.subr.bf16.mxu0 %v1102
    %1382 = vmatpush1.bf16.msra.mxu0 %v1101
    %1383 = vmatprep.subr.bf16.mxu0 %v1105
    %1384 = vmatpush1.bf16.msra.mxu0 %v1104
    %1385 = vmatprep.subr.bf16.mxu0 %v1108
    %1386 = vmatpush1.bf16.msra.mxu0 %v1107
    %1387 = vmatprep.subr.bf16.mxu0 %v1111
    %1388 = vmatpush1.bf16.msra.mxu0 %v1110
    %1389 = vmatprep.subr.bf16.mxu0 %v1114
    %1390 = vmatpush1.bf16.msra.mxu0 %v1113
    %1391 = vmatprep.subr.bf16.mxu0 %v1117
    %1392 = vmatpush1.bf16.msra.mxu0 %v1116
    %1393 = vmatprep.subr.bf16.mxu0 %v1120
    %1394 = vmatpush1.bf16.msra.mxu0 %v1119
    %1395 = vmatprep.subr.bf16.mxu0 %v1123
    %1396 = vmatpush1.bf16.msra.mxu0 %v1122
    %1397 = vmatprep.mubr.bf16.mxu0 %v276
    %1398 = vmatmul.mubr.bf16.gmra.mrb[0].mxu0 %v275
    %v1399 = vpop.f32.mrb[0].mxu0
    %v1400 = vadd.f32 %v1357, %v1399
    %v1401 = vpop.f32.mrb[0].mxu0
    %v1402 = vadd.f32 %v1359, %v1401
    %v1403 = vpop.f32.mrb[0].mxu0
    %v1404 = vadd.f32 %v1361, %v1403
    %v1405 = vpop.f32.mrb[0].mxu0
    %v1406 = vadd.f32 %v1363, %v1405
    %1407 = vdwg.mxu0
    %1408 = vmatprep.subr.bf16.mxu0 %v1126
    %1409 = vmatpush1.bf16.msra.mxu0 %v1125
    %1410 = vmatprep.subr.bf16.mxu0 0
    %1411 = vmatpush1.bf16.msra.mxu0 0
    %1412 = vmatprep.subr.bf16.mxu0 0
    %1413 = vmatpush1.bf16.msra.mxu0 0
    %1414 = vmatprep.subr.bf16.mxu0 0
    %1415 = vmatpush1.bf16.msra.mxu0 0
    %1416 = vmatprep.subr.bf16.mxu0 0
    %1417 = vmatpush1.bf16.msra.mxu0 0
    %1418 = vmatprep.subr.bf16.mxu0 0
    %1419 = vmatpush1.bf16.msra.mxu0 0
    %1420 = vmatprep.subr.bf16.mxu0 0
    %1421 = vmatpush1.bf16.msra.mxu0 0
    %1422 = vmatprep.subr.bf16.mxu0 0
    %1423 = vmatpush1.bf16.msra.mxu0 0
    %1424 = vmatprep.subr.bf16.mxu0 0
    %1425 = vmatpush1.bf16.msra.mxu0 0
    %1426 = vmatprep.subr.bf16.mxu0 0
    %1427 = vmatpush1.bf16.msra.mxu0 0
    %1428 = vmatprep.subr.bf16.mxu0 0
    %1429 = vmatpush1.bf16.msra.mxu0 0
    %1430 = vmatprep.subr.bf16.mxu0 0
    %1431 = vmatpush1.bf16.msra.mxu0 0
    %1432 = vmatprep.subr.bf16.mxu0 0
    %1433 = vmatpush1.bf16.msra.mxu0 0
    %1434 = vmatprep.subr.bf16.mxu0 0
    %1435 = vmatpush1.bf16.msra.mxu0 0
    %1436 = vmatprep.subr.bf16.mxu0 0
    %1437 = vmatpush1.bf16.msra.mxu0 0
    %1438 = vmatprep.subr.bf16.mxu0 0
    %1439 = vmatpush1.bf16.msra.mxu0 0
    %1440 = vmatprep.mubr.bf16.mxu0 0
    %1441 = vmatmul.mubr.bf16.gmra.mrb[0].mxu0 %v1277
    %v1442 = vpop.f32.mrb[0].mxu0
    %v1443 = vadd.f32 %v1400, %v1442
    %v1444 = vpop.f32.mrb[0].mxu0
    %v1445 = vadd.f32 %v1402, %v1444
    %v1446 = vpop.f32.mrb[0].mxu0
    %v1447 = vadd.f32 %v1404, %v1446
    %v1448 = vpop.f32.mrb[0].mxu0
    %v1449 = vadd.f32 %v1406, %v1448
    %1450 = vdwg.mxu0
    %1451 = vmatprep.subr.bf16.mxu0 0
    %1452 = vmatpush1.bf16.msra.mxu0 %v983
    %1453 = vmatprep.subr.bf16.mxu0 0
    %1454 = vmatpush1.bf16.msra.mxu0 %v986
    %1455 = vmatprep.subr.bf16.mxu0 0
    %1456 = vmatpush1.bf16.msra.mxu0 %v989
    %1457 = vmatprep.subr.bf16.mxu0 0
    %1458 = vmatpush1.bf16.msra.mxu0 %v992
    %1459 = vmatprep.subr.bf16.mxu0 0
    %1460 = vmatpush1.bf16.msra.mxu0 %v995
    %1461 = vmatprep.subr.bf16.mxu0 0
    %1462 = vmatpush1.bf16.msra.mxu0 %v998
    %1463 = vmatprep.subr.bf16.mxu0 0
    %1464 = vmatpush1.bf16.msra.mxu0 %v1001
    %1465 = vmatprep.subr.bf16.mxu0 0
    %1466 = vmatpush1.bf16.msra.mxu0 %v1004
    %1467 = vmatprep.subr.bf16.mxu0 0
    %1468 = vmatpush1.bf16.msra.mxu0 %v1007
    %1469 = vmatprep.subr.bf16.mxu0 0
    %1470 = vmatpush1.bf16.msra.mxu0 %v1010
    %1471 = vmatprep.subr.bf16.mxu0 0
    %1472 = vmatpush1.bf16.msra.mxu0 %v1013
    %1473 = vmatprep.subr.bf16.mxu0 0
    %1474 = vmatpush1.bf16.msra.mxu0 %v1016
    %1475 = vmatprep.subr.bf16.mxu0 0
    %1476 = vmatpush1.bf16.msra.mxu0 %v1019
    %1477 = vmatprep.subr.bf16.mxu0 0
    %1478 = vmatpush1.bf16.msra.mxu0 %v1022
    %1479 = vmatprep.subr.bf16.mxu0 0
    %1480 = vmatpush1.bf16.msra.mxu0 %v1025
    %1481 = vmatprep.subr.bf16.mxu0 0
    %1482 = vmatpush1.bf16.msra.mxu0 %v1028
    %1483 = vmatprep.mubr.bf16.mxu0 %v272
    %1484 = vmatmul.mubr.bf16.gmra.mrb[0].mxu0 %v271
    %v1485 = vpop.f32.mrb[0].mxu0
    %v1486 = vadd.f32 %v487, %v1485
    %v1487 = vpop.f32.mrb[0].mxu0
    %v1488 = vpop.f32.mrb[0].mxu0
    %v1489 = vadd.f32 %v487, %v1488
    %v1490 = vpop.f32.mrb[0].mxu0
    %1491 = vdwg.mxu0
    %1492 = vmatprep.subr.bf16.mxu0 0
    %1493 = vmatpush1.bf16.msra.mxu0 %v1031
    %1494 = vmatprep.subr.bf16.mxu0 0
    %1495 = vmatpush1.bf16.msra.mxu0 %v1034
    %1496 = vmatprep.subr.bf16.mxu0 0
    %1497 = vmatpush1.bf16.msra.mxu0 %v1037
    %1498 = vmatprep.subr.bf16.mxu0 0
    %1499 = vmatpush1.bf16.msra.mxu0 %v1040
    %1500 = vmatprep.subr.bf16.mxu0 0
    %1501 = vmatpush1.bf16.msra.mxu0 %v1043
    %1502 = vmatprep.subr.bf16.mxu0 0
    %1503 = vmatpush1.bf16.msra.mxu0 %v1046
    %1504 = vmatprep.subr.bf16.mxu0 0
    %1505 = vmatpush1.bf16.msra.mxu0 %v1049
    %1506 = vmatprep.subr.bf16.mxu0 0
    %1507 = vmatpush1.bf16.msra.mxu0 %v1052
    %1508 = vmatprep.subr.bf16.mxu0 0
    %1509 = vmatpush1.bf16.msra.mxu0 %v1055
    %1510 = vmatprep.subr.bf16.mxu0 0
    %1511 = vmatpush1.bf16.msra.mxu0 %v1058
    %1512 = vmatprep.subr.bf16.mxu0 0
    %1513 = vmatpush1.bf16.msra.mxu0 %v1061
    %1514 = vmatprep.subr.bf16.mxu0 0
    %1515 = vmatpush1.bf16.msra.mxu0 %v1064
    %1516 = vmatprep.subr.bf16.mxu0 0
    %1517 = vmatpush1.bf16.msra.mxu0 %v1067
    %1518 = vmatprep.subr.bf16.mxu0 0
    %1519 = vmatpush1.bf16.msra.mxu0 %v1070
    %1520 = vmatprep.subr.bf16.mxu0 0
    %1521 = vmatpush1.bf16.msra.mxu0 %v1073
    %1522 = vmatprep.subr.bf16.mxu0 0
    %1523 = vmatpush1.bf16.msra.mxu0 %v1076
    %1524 = vmatprep.mubr.bf16.mxu0 %v274
    %1525 = vmatmul.mubr.bf16.gmra.mrb[0].mxu0 %v273
    %v1526 = vpop.f32.mrb[0].mxu0
    %v1527 = vadd.f32 %v1486, %v1526
    %v1528 = vpop.f32.mrb[0].mxu0
    %v1529 = vpop.f32.mrb[0].mxu0
    %v1530 = vadd.f32 %v1489, %v1529
    %v1531 = vpop.f32.mrb[0].mxu0
    %1532 = vdwg.mxu0
    %1533 = vmatprep.subr.bf16.mxu0 0
    %1534 = vmatpush1.bf16.msra.mxu0 %v1079
    %1535 = vmatprep.subr.bf16.mxu0 0
    %1536 = vmatpush1.bf16.msra.mxu0 %v1082
    %1537 = vmatprep.subr.bf16.mxu0 0
    %1538 = vmatpush1.bf16.msra.mxu0 %v1085
    %1539 = vmatprep.subr.bf16.mxu0 0
    %1540 = vmatpush1.bf16.msra.mxu0 %v1088
    %1541 = vmatprep.subr.bf16.mxu0 0
    %1542 = vmatpush1.bf16.msra.mxu0 %v1091
    %1543 = vmatprep.subr.bf16.mxu0 0
    %1544 = vmatpush1.bf16.msra.mxu0 %v1094
    %1545 = vmatprep.subr.bf16.mxu0 0
    %1546 = vmatpush1.bf16.msra.mxu0 %v1097
    %1547 = vmatprep.subr.bf16.mxu0 0
    %1548 = vmatpush1.bf16.msra.mxu0 %v1100
    %1549 = vmatprep.subr.bf16.mxu0 0
    %1550 = vmatpush1.bf16.msra.mxu0 %v1103
    %1551 = vmatprep.subr.bf16.mxu0 0
    %1552 = vmatpush1.bf16.msra.mxu0 %v1106
    %1553 = vmatprep.subr.bf16.mxu0 0
    %1554 = vmatpush1.bf16.msra.mxu0 %v1109
    %1555 = vmatprep.subr.bf16.mxu0 0
    %1556 = vmatpush1.bf16.msra.mxu0 %v1112
    %1557 = vmatprep.subr.bf16.mxu0 0
    %1558 = vmatpush1.bf16.msra.mxu0 %v1115
    %1559 = vmatprep.subr.bf16.mxu0 0
    %1560 = vmatpush1.bf16.msra.mxu0 %v1118
    %1561 = vmatprep.subr.bf16.mxu0 0
    %1562 = vmatpush1.bf16.msra.mxu0 %v1121
    %1563 = vmatprep.subr.bf16.mxu0 0
    %1564 = vmatpush1.bf16.msra.mxu0 %v1124
    %1565 = vmatprep.mubr.bf16.mxu0 %v276
    %1566 = vmatmul.mubr.bf16.gmra.mrb[0].mxu0 %v275
    %v1567 = vpop.f32.mrb[0].mxu0
    %v1568 = vadd.f32 %v1527, %v1567
    %v1569 = vpop.f32.mrb[0].mxu0
    %v1570 = vpop.f32.mrb[0].mxu0
    %v1571 = vadd.f32 %v1530, %v1570
    %v1572 = vpop.f32.mrb[0].mxu0
    %1573 = vdwg.mxu0
    %1574 = vmatprep.subr.bf16.mxu0 0
    %1575 = vmatpush1.bf16.msra.mxu0 %v1127
    %1576 = vmatprep.subr.bf16.mxu0 0
    %1577 = vmatpush1.bf16.msra.mxu0 0
    %1578 = vmatprep.subr.bf16.mxu0 0
    %1579 = vmatpush1.bf16.msra.mxu0 0
    %1580 = vmatprep.subr.bf16.mxu0 0
    %1581 = vmatpush1.bf16.msra.mxu0 0
    %1582 = vmatprep.subr.bf16.mxu0 0
    %1583 = vmatpush1.bf16.msra.mxu0 0
    %1584 = vmatprep.subr.bf16.mxu0 0
    %1585 = vmatpush1.bf16.msra.mxu0 0
    %1586 = vmatprep.subr.bf16.mxu0 0
    %1587 = vmatpush1.bf16.msra.mxu0 0
    %1588 = vmatprep.subr.bf16.mxu0 0
    %1589 = vmatpush1.bf16.msra.mxu0 0
    %1590 = vmatprep.subr.bf16.mxu0 0
    %1591 = vmatpush1.bf16.msra.mxu0 0
    %1592 = vmatprep.subr.bf16.mxu0 0
    %1593 = vmatpush1.bf16.msra.mxu0 0
    %1594 = vmatprep.subr.bf16.mxu0 0
    %1595 = vmatpush1.bf16.msra.mxu0 0
    %1596 = vmatprep.subr.bf16.mxu0 0
    %1597 = vmatpush1.bf16.msra.mxu0 0
    %1598 = vmatprep.subr.bf16.mxu0 0
    %1599 = vmatpush1.bf16.msra.mxu0 0
    %1600 = vmatprep.subr.bf16.mxu0 0
    %1601 = vmatpush1.bf16.msra.mxu0 0
    %1602 = vmatprep.subr.bf16.mxu0 0
    %1603 = vmatpush1.bf16.msra.mxu0 0
    %1604 = vmatprep.subr.bf16.mxu0 0
    %1605 = vmatpush1.bf16.msra.mxu0 0
    %1606 = vmatprep.mubr.bf16.mxu0 0
    %1607 = vmatmul.mubr.bf16.gmra.mrb[0].mxu0 %v1277
    %v1608 = vpop.f32.mrb[0].mxu0
    %v1609 = vadd.f32 %v1568, %v1608
    %v1610 = vpop.f32.mrb[0].mxu0
    %v1611 = vpop.f32.mrb[0].mxu0
    %v1612 = vadd.f32 %v1571, %v1611
    %v1613 = vpop.f32.mrb[0].mxu0
    %1614 = vdwg.mxu0
    %v1615 = vmax.f32 %v1443, 0.0
    %v1616 = vmax.f32 %v1445, 0.0
    %v1617 = vmax.f32 %v1609, 0.0
    %v1618 = vmax.f32 %v1447, 0.0
    %v1619 = vmax.f32 %v1449, 0.0
    %v1620 = vmax.f32 %v1612, 0.0
    %v1621 = vpack.c.bf16 %v1618, %v1615
    %v1622 = vpack.c.bf16 %v1619, %v1616
    %v1623 = vpack.c.bf16 %v1620, %v1617
    %v1624 = vld [vmem:[#allocation7] sm:$0xf]
    %v1625 = vld [vmem:[#allocation7 + $0x4] sm:$0xf]
    %v1626 = vld [vmem:[#allocation7 + $0x8] sm:$0xf]
    %v1627 = vld [vmem:[#allocation7 + $0xc] sm:$0xf]
    %v1628 = vld [vmem:[#allocation7 + $0x10] sm:$0xf]
    %v1629 = vld [vmem:[#allocation7 + $0x14] sm:$0xf]
    %v1630 = vld [vmem:[#allocation7 + $0x18] sm:$0xf]
    %v1631 = vld [vmem:[#allocation7 + $0x1c] sm:$0xf]
    %v1632 = vld [vmem:[#allocation7 + $0x20] sm:$0xf]
    %v1633 = vld [vmem:[#allocation7 + $0x24] sm:$0xf]
    %v1634 = vld [vmem:[#allocation7 + $0x28] sm:$0xf]
    %v1635 = vld [vmem:[#allocation7 + $0x2c] sm:$0xf]
    %v1636 = vld [vmem:[#allocation7 + $0x30] sm:$0xf]
    %v1637 = vld [vmem:[#allocation7 + $0x34] sm:$0xf]
    %v1638 = vld [vmem:[#allocation7 + $0x38] sm:$0xf]
    %v1639 = vld [vmem:[#allocation7 + $0x3c] sm:$0xf]
    %v1640 = vld [vmem:[#allocation7 + $0x40] sm:$0xf]
    %v1641 = vld [vmem:[#allocation7 + $0x44] sm:$0xf]
    %v1642 = vld [vmem:[#allocation7 + $0x48] sm:$0xf]
    %v1643 = vld [vmem:[#allocation7 + $0x4c] sm:$0xf]
    %v1644 = vld [vmem:[#allocation7 + $0x50] sm:$0xf]
    %v1645 = vld [vmem:[#allocation7 + $0x54] sm:$0xf]
    %v1646 = vld [vmem:[#allocation7 + $0x58] sm:$0xf]
    %v1647 = vld [vmem:[#allocation7 + $0x5c] sm:$0xf]
    %v1648 = vld [vmem:[#allocation7 + $0x60] sm:$0xf]
    %v1649 = vld [vmem:[#allocation7 + $0x64] sm:$0xf]
    %v1650 = vld [vmem:[#allocation7 + $0x68] sm:$0xf]
    %v1651 = vld [vmem:[#allocation7 + $0x6c] sm:$0xf]
    %v1652 = vld [vmem:[#allocation7 + $0x70] sm:$0xf]
    %v1653 = vld [vmem:[#allocation7 + $0x74] sm:$0xf]
    %v1654 = vld [vmem:[#allocation7 + $0x78] sm:$0xf]
    %v1655 = vld [vmem:[#allocation7 + $0x7c] sm:$0xf]
    %v1656 = vld [vmem:[#allocation7 + $0x80] sm:$0xf]
    %v1657 = vld [vmem:[#allocation7 + $0x84] sm:$0xf]
    %v1658 = vld [vmem:[#allocation7 + $0x88] sm:$0xf]
    %v1659 = vld [vmem:[#allocation7 + $0x8c] sm:$0xf]
    %v1660 = vld [vmem:[#allocation7 + $0x90] sm:$0xf]
    %v1661 = vld [vmem:[#allocation7 + $0x94] sm:$0xf]
    %v1662 = vld [vmem:[#allocation7 + $0x98] sm:$0xf]
    %v1663 = vld [vmem:[#allocation7 + $0x9c] sm:$0xf]
    %v1664 = vld [vmem:[#allocation7 + $0xa0] sm:$0xf]
    %v1665 = vld [vmem:[#allocation7 + $0xa4] sm:$0xf]
    %v1666 = vld [vmem:[#allocation7 + $0xa8] sm:$0xf]
    %v1667 = vld [vmem:[#allocation7 + $0xac] sm:$0xf]
    %v1668 = vld [vmem:[#allocation7 + $0xb0] sm:$0xf]
    %v1669 = vld [vmem:[#allocation7 + $0xb4] sm:$0xf]
    %v1670 = vld [vmem:[#allocation7 + $0xb8] sm:$0xf]
    %v1671 = vld [vmem:[#allocation7 + $0xbc] sm:$0xf]
    %v1672 = vld [vmem:[%s4] sm:$0x1]
    %v1674 = vlaneseq
    %v1675 = vshrl.u32 %v1674, 7
    %v1676 = vsub.s32 0, %v1675
    %v1677 = vrot.slane %v1672, %v1676
    %v1727 = vunpack.c.l.b16 %v1624
    %v1728 = vunpack.c.l.b16 %v1625
    %v1729 = vunpack.c.l.b16 %v1626
    %v1730 = vunpack.c.l.b16 %v1627
    %v1731 = vunpack.c.l.b16 %v1628
    %v1732 = vunpack.c.l.b16 %v1629
    %v1733 = vunpack.c.l.b16 %v1630
    %v1734 = vunpack.c.l.b16 %v1631
    %v1735 = vunpack.c.l.b16 %v1632
    %v1736 = vunpack.c.l.b16 %v1633
    %v1737 = vunpack.c.l.b16 %v1634
    %v1738 = vunpack.c.l.b16 %v1635
    %v1739 = vunpack.c.l.b16 %v1636
    %v1740 = vunpack.c.l.b16 %v1637
    %v1741 = vunpack.c.l.b16 %v1638
    %v1742 = vunpack.c.l.b16 %v1639
    %v1743 = vunpack.c.l.b16 %v1640
    %v1744 = vunpack.c.l.b16 %v1641
    %v1745 = vunpack.c.l.b16 %v1642
    %v1746 = vunpack.c.l.b16 %v1643
    %v1747 = vunpack.c.l.b16 %v1644
    %v1748 = vunpack.c.l.b16 %v1645
    %v1749 = vunpack.c.l.b16 %v1646
    %v1750 = vunpack.c.l.b16 %v1647
    %v1751 = vunpack.c.l.b16 %v1648
    %v1752 = vunpack.c.l.b16 %v1649
    %v1753 = vunpack.c.l.b16 %v1650
    %v1754 = vunpack.c.l.b16 %v1651
    %v1755 = vunpack.c.l.b16 %v1652
    %v1756 = vunpack.c.l.b16 %v1653
    %v1757 = vunpack.c.l.b16 %v1654
    %v1758 = vunpack.c.l.b16 %v1655
    %v1759 = vunpack.c.l.b16 %v1656
    %v1760 = vunpack.c.l.b16 %v1657
    %v1761 = vunpack.c.l.b16 %v1658
    %v1762 = vunpack.c.l.b16 %v1659
    %v1763 = vunpack.c.l.b16 %v1660
    %v1764 = vunpack.c.l.b16 %v1661
    %v1765 = vunpack.c.l.b16 %v1662
    %v1766 = vunpack.c.l.b16 %v1663
    %v1767 = vunpack.c.l.b16 %v1664
    %v1768 = vunpack.c.l.b16 %v1665
    %v1769 = vunpack.c.l.b16 %v1666
    %v1770 = vunpack.c.l.b16 %v1667
    %v1771 = vunpack.c.l.b16 %v1668
    %v1772 = vunpack.c.l.b16 %v1669
    %v1773 = vunpack.c.l.b16 %v1670
    %v1774 = vunpack.c.l.b16 %v1671
    %v1775 = vpack.c.b16 %v1728, %v1727
    %v1776 = vpack.c.b16 %v1730, %v1729
    %v1777 = vpack.c.b16 %v1732, %v1731
    %v1778 = vpack.c.b16 %v1734, %v1733
    %v1779 = vpack.c.b16 %v1736, %v1735
    %v1780 = vpack.c.b16 %v1738, %v1737
    %v1781 = vpack.c.b16 %v1740, %v1739
    %v1782 = vpack.c.b16 %v1742, %v1741
    %v1783 = vpack.c.b16 %v1744, %v1743
    %v1784 = vpack.c.b16 %v1746, %v1745
    %v1785 = vpack.c.b16 %v1748, %v1747
    %v1786 = vpack.c.b16 %v1750, %v1749
    %v1787 = vpack.c.b16 %v1752, %v1751
    %v1788 = vpack.c.b16 %v1754, %v1753
    %v1789 = vpack.c.b16 %v1756, %v1755
    %v1790 = vpack.c.b16 %v1758, %v1757
    %v1791 = vpack.c.b16 %v1760, %v1759
    %v1792 = vpack.c.b16 %v1762, %v1761
    %v1793 = vpack.c.b16 %v1764, %v1763
    %v1794 = vpack.c.b16 %v1766, %v1765
    %v1795 = vpack.c.b16 %v1768, %v1767
    %v1796 = vpack.c.b16 %v1770, %v1769
    %v1797 = vpack.c.b16 %v1772, %v1771
    %v1798 = vpack.c.b16 %v1774, %v1773
    %1823 = vmatprep.subr.bf16.mxu0 0
    %1824 = vmatpush1.bf16.msra.mxu0 %v1775
    %1825 = vmatprep.subr.bf16.mxu0 0
    %1826 = vmatpush1.bf16.msra.mxu0 %v1776
    %1827 = vmatprep.subr.bf16.mxu0 0
    %1828 = vmatpush1.bf16.msra.mxu0 %v1777
    %1829 = vmatprep.subr.bf16.mxu0 0
    %1830 = vmatpush1.bf16.msra.mxu0 %v1778
    %1831 = vmatprep.subr.bf16.mxu0 0
    %1832 = vmatpush1.bf16.msra.mxu0 %v1779
    %1833 = vmatprep.subr.bf16.mxu0 0
    %1834 = vmatpush1.bf16.msra.mxu0 %v1780
    %1835 = vmatprep.subr.bf16.mxu0 0
    %1836 = vmatpush1.bf16.msra.mxu0 %v1781
    %1837 = vmatprep.subr.bf16.mxu0 0
    %1838 = vmatpush1.bf16.msra.mxu0 %v1782
    %1839 = vmatprep.subr.bf16.mxu0 0
    %1840 = vmatpush1.bf16.msra.mxu0 %v1783
    %1841 = vmatprep.subr.bf16.mxu0 0
    %1842 = vmatpush1.bf16.msra.mxu0 %v1784
    %1843 = vmatprep.subr.bf16.mxu0 0
    %1844 = vmatpush1.bf16.msra.mxu0 %v1785
    %1845 = vmatprep.subr.bf16.mxu0 0
    %1846 = vmatpush1.bf16.msra.mxu0 %v1786
    %1847 = vmatprep.subr.bf16.mxu0 0
    %1848 = vmatpush1.bf16.msra.mxu0 %v1787
    %1849 = vmatprep.subr.bf16.mxu0 0
    %1850 = vmatpush1.bf16.msra.mxu0 %v1788
    %1851 = vmatprep.subr.bf16.mxu0 0
    %1852 = vmatpush1.bf16.msra.mxu0 %v1789
    %1853 = vmatprep.subr.bf16.mxu0 0
    %1854 = vmatpush1.bf16.msra.mxu0 %v1790
    %1855 = vmatprep.mubr.bf16.mxu0 %v1622
    %1856 = vmatmul.mubr.bf16.gmra.mrb[0].mxu0 %v1621
    %v1857 = vpop.f32.mrb[0].mxu0
    %v1858 = vadd.f32 %v1677, %v1857
    %v1859 = vpop.f32.mrb[0].mxu0
    %v1860 = vpop.f32.mrb[0].mxu0
    %v1861 = vadd.f32 %v1677, %v1860
    %v1862 = vpop.f32.mrb[0].mxu0
    %1863 = vdwg.mxu0
    %1864 = vmatprep.subr.bf16.mxu0 0
    %1865 = vmatpush1.bf16.msra.mxu0 %v1791
    %1866 = vmatprep.subr.bf16.mxu0 0
    %1867 = vmatpush1.bf16.msra.mxu0 %v1792
    %1868 = vmatprep.subr.bf16.mxu0 0
    %1869 = vmatpush1.bf16.msra.mxu0 %v1793
    %1870 = vmatprep.subr.bf16.mxu0 0
    %1871 = vmatpush1.bf16.msra.mxu0 %v1794
    %1872 = vmatprep.subr.bf16.mxu0 0
    %1873 = vmatpush1.bf16.msra.mxu0 %v1795
    %1874 = vmatprep.subr.bf16.mxu0 0
    %1875 = vmatpush1.bf16.msra.mxu0 %v1796
    %1876 = vmatprep.subr.bf16.mxu0 0
    %1877 = vmatpush1.bf16.msra.mxu0 %v1797
    %1878 = vmatprep.subr.bf16.mxu0 0
    %1879 = vmatpush1.bf16.msra.mxu0 %v1798
    %1880 = vmatprep.subr.bf16.mxu0 0
    %1881 = vmatpush1.bf16.msra.mxu0 0
    %1882 = vmatprep.subr.bf16.mxu0 0
    %1883 = vmatpush1.bf16.msra.mxu0 0
    %1884 = vmatprep.subr.bf16.mxu0 0
    %1885 = vmatpush1.bf16.msra.mxu0 0
    %1886 = vmatprep.subr.bf16.mxu0 0
    %1887 = vmatpush1.bf16.msra.mxu0 0
    %1888 = vmatprep.subr.bf16.mxu0 0
    %1889 = vmatpush1.bf16.msra.mxu0 0
    %1890 = vmatprep.subr.bf16.mxu0 0
    %1891 = vmatpush1.bf16.msra.mxu0 0
    %1892 = vmatprep.subr.bf16.mxu0 0
    %1893 = vmatpush1.bf16.msra.mxu0 0
    %1894 = vmatprep.subr.bf16.mxu0 0
    %1895 = vmatpush1.bf16.msra.mxu0 0
    %1896 = vmatprep.mubr.bf16.mxu0 0
    %1897 = vmatmul.mubr.bf16.gmra.mrb[0].mxu0 %v1623
    %v1898 = vpop.f32.mrb[0].mxu0
    %v1899 = vadd.f32 %v1858, %v1898
    %v1900 = vpop.f32.mrb[0].mxu0
    %v1901 = vpop.f32.mrb[0].mxu0
    %v1902 = vadd.f32 %v1861, %v1901
    %v1903 = vpop.f32.mrb[0].mxu0
    %1904 = vdwg.mxu0
    %v1905 = vmax.f32 %v1899, 0.0
    %v1906 = vmax.f32 %v1902, 0.0
    %v1907 = vpack.c.bf16 %v1906, %v1905
    %v1908 = vld [vmem:[#allocation8] sm:$0xf]
    %v1909 = vld [vmem:[#allocation8 + $0x4] sm:$0xf]
    %v1910 = vld [vmem:[#allocation8 + $0x8] sm:$0xf]
    %v1911 = vld [vmem:[#allocation8 + $0xc] sm:$0xf]
    %v1912 = vld [vmem:[#allocation8 + $0x10] sm:$0xf]
    %v1913 = vld [vmem:[#allocation8 + $0x14] sm:$0xf]
    %v1914 = vld [vmem:[#allocation8 + $0x18] sm:$0xf]
    %v1915 = vld [vmem:[#allocation8 + $0x1c] sm:$0xf]
    %v1916 = vld [vmem:[#allocation8 + $0x20] sm:$0xf]
    %v1917 = vld [vmem:[#allocation8 + $0x24] sm:$0xf]
    %v1918 = vld [vmem:[#allocation8 + $0x28] sm:$0xf]
    %v1919 = vld [vmem:[#allocation8 + $0x2c] sm:$0xf]
    %v1920 = vld [vmem:[#allocation8 + $0x30] sm:$0xf]
    %v1921 = vld [vmem:[#allocation8 + $0x34] sm:$0xf]
    %v1922 = vld [vmem:[#allocation8 + $0x38] sm:$0xf]
    %v1923 = vld [vmem:[#allocation8 + $0x3c] sm:$0xf]
    %v1924 = vld [vmem:[%s6] sm:$0x1]
    %v1926 = vlaneseq
    %v1927 = vshrl.u32 %v1926, 7
    %v1928 = vsub.s32 0, %v1927
    %v1929 = vrot.slane %v1924, %v1928
    %v1947 = vunpack.c.l.b16 %v1908
    %v1948 = vunpack.c.l.b16 %v1909
    %v1949 = vunpack.c.l.b16 %v1910
    %v1950 = vunpack.c.l.b16 %v1911
    %v1951 = vunpack.c.l.b16 %v1912
    %v1952 = vunpack.c.l.b16 %v1913
    %v1953 = vunpack.c.l.b16 %v1914
    %v1954 = vunpack.c.l.b16 %v1915
    %v1955 = vunpack.c.l.b16 %v1916
    %v1956 = vunpack.c.l.b16 %v1917
    %v1957 = vunpack.c.l.b16 %v1918
    %v1958 = vunpack.c.l.b16 %v1919
    %v1959 = vunpack.c.l.b16 %v1920
    %v1960 = vunpack.c.l.b16 %v1921
    %v1961 = vunpack.c.l.b16 %v1922
    %v1962 = vunpack.c.l.b16 %v1923
    %v1963 = vpack.c.b16 %v1948, %v1947
    %v1964 = vpack.c.b16 %v1950, %v1949
    %v1965 = vpack.c.b16 %v1952, %v1951
    %v1966 = vpack.c.b16 %v1954, %v1953
    %v1967 = vpack.c.b16 %v1956, %v1955
    %v1968 = vpack.c.b16 %v1958, %v1957
    %v1969 = vpack.c.b16 %v1960, %v1959
    %v1970 = vpack.c.b16 %v1962, %v1961
    %1979 = vmatprep.subr.bf16.mxu0 0
    %1980 = vmatpush1.bf16.msra.mxu0 %v1963
    %1981 = vmatprep.subr.bf16.mxu0 0
    %1982 = vmatpush1.bf16.msra.mxu0 %v1964
    %1983 = vmatprep.subr.bf16.mxu0 0
    %1984 = vmatpush1.bf16.msra.mxu0 %v1965
    %1985 = vmatprep.subr.bf16.mxu0 0
    %1986 = vmatpush1.bf16.msra.mxu0 %v1966
    %1987 = vmatprep.subr.bf16.mxu0 0
    %1988 = vmatpush1.bf16.msra.mxu0 %v1967
    %1989 = vmatprep.subr.bf16.mxu0 0
    %1990 = vmatpush1.bf16.msra.mxu0 %v1968
    %1991 = vmatprep.subr.bf16.mxu0 0
    %1992 = vmatpush1.bf16.msra.mxu0 %v1969
    %1993 = vmatprep.subr.bf16.mxu0 0
    %1994 = vmatpush1.bf16.msra.mxu0 %v1970
    %1995 = vmatprep.subr.bf16.mxu0 0
    %1996 = vmatpush1.bf16.msra.mxu0 0
    %1997 = vmatprep.subr.bf16.mxu0 0
    %1998 = vmatpush1.bf16.msra.mxu0 0
    %1999 = vmatprep.subr.bf16.mxu0 0
    %2000 = vmatpush1.bf16.msra.mxu0 0
    %2001 = vmatprep.subr.bf16.mxu0 0
    %2002 = vmatpush1.bf16.msra.mxu0 0
    %2003 = vmatprep.subr.bf16.mxu0 0
    %2004 = vmatpush1.bf16.msra.mxu0 0
    %2005 = vmatprep.subr.bf16.mxu0 0
    %2006 = vmatpush1.bf16.msra.mxu0 0
    %2007 = vmatprep.subr.bf16.mxu0 0
    %2008 = vmatpush1.bf16.msra.mxu0 0
    %2009 = vmatprep.subr.bf16.mxu0 0
    %2010 = vmatpush1.bf16.msra.mxu0 0
    %2011 = vmatprep.mubr.bf16.mxu0 0
    %2012 = vmatmul.mubr.bf16.gmra.mrb[0].mxu0 %v1907
    %v2013 = vpop.f32.mrb[0].mxu0
    %v2014 = vadd.f32 %v1929, %v2013
    %v2015 = vpop.f32.mrb[0].mxu0
    %v2016 = vpop.f32.mrb[0].mxu0
    %v2017 = vadd.f32 %v1929, %v2016
    %v2018 = vpop.f32.mrb[0].mxu0
    %2019 = vdwg.mxu0
    %v2020 = vpack.c.bf16 %v2017, %v2014
    %v2022 = vcombine.high %v2020, %v2020
    %v2024 = vunpack.c.l.s4 1966171168
    %v2025 = vunpack.c.0.s8 %v2024
    %v2026 = vlaneseq
    %v2027 = vshrl.u32 %v2026, 7
    %v2028 = vsub.s32 %v2025, %v2027
    %v2029 = vrot.slane %v2020, %v2028
    %v2031 = vunpack.c.l.s4 1966171168
    %v2032 = vunpack.c.0.s8 %v2031
    %v2033 = vlaneseq
    %v2034 = vshrl.u32 %v2033, 7
    %v2035 = vsub.s32 %v2032, %v2034
    %v2036 = vrot.slane %v2022, %v2035
    %v2037 = vcombine.high %v2029, %v2029
    %v2038 = vcombine.high %v2036, %v2036
    %v2040 = vunpack.c.l.s4 1966171168
    %v2041 = vunpack.c.0.s8 %v2040
    %v2042 = vlaneseq
    %v2043 = vshrl.u32 %v2042, 7
    %v2044 = vsub.s32 %v2041, %v2043
    %v2045 = vrot.slane %v2029, %v2044
    %v2047 = vunpack.c.l.s4 1966171168
    %v2048 = vunpack.c.0.s8 %v2047
    %v2049 = vlaneseq
    %v2050 = vshrl.u32 %v2049, 7
    %v2051 = vsub.s32 %v2048, %v2050
    %v2052 = vrot.slane %v2036, %v2051
    %v2054 = vunpack.c.l.s4 1966171168
    %v2055 = vunpack.c.0.s8 %v2054
    %v2056 = vlaneseq
    %v2057 = vshrl.u32 %v2056, 7
    %v2058 = vsub.s32 %v2055, %v2057
    %v2059 = vrot.slane %v2037, %v2058
    %v2061 = vunpack.c.l.s4 1966171168
    %v2062 = vunpack.c.0.s8 %v2061
    %v2063 = vlaneseq
    %v2064 = vshrl.u32 %v2063, 7
    %v2065 = vsub.s32 %v2062, %v2064
    %v2066 = vrot.slane %v2038, %v2065
    %v2067 = vcombine.high %v2045, %v2045
    %v2068 = vcombine.high %v2052, %v2052
    %v2069 = vcombine.high %v2059, %v2059
    %v2070 = vcombine.high %v2066, %v2066
    %2079 = vst [vmem:[#allocation10] sm:$0x1] %v2045
    %2080 = vst [vmem:[#allocation10 + $0x1] sm:$0x1] %v2059
    %2081 = vst [vmem:[#allocation10 + $0x2] sm:$0x1] %v2067
    %2082 = vst [vmem:[#allocation10 + $0x3] sm:$0x1] %v2069
    %2083 = vst [vmem:[#allocation10 + $0x4] sm:$0x1] %v2052
    %2084 = vst [vmem:[#allocation10 + $0x5] sm:$0x1] %v2066
    %2085 = vst [vmem:[#allocation10 + $0x6] sm:$0x1] %v2068
    %2086 = vst [vmem:[#allocation10 + $0x7] sm:$0x1] %v2070
    // Predicated region
    $region46: #{tpu_custom_call.1} parent=1 // pred_check
      _
    $region47: #{tpu_custom_call.1} parent=1 // pred_check_branch
      %2088 = sbr.rel (0) target = $region49
    $region48: #{tpu_custom_call.1} parent=1 // pred_region
      %s2090 = ssub.s32 128, 16
      %2091 = vsyncadd [#allocation4], %s2090
      %s2092 = sshll.u32 [#allocation10], 4
      %s2093 = int_to_ptr.vmem [resolvable:$true] %s2092
      %2098 = dma.vmem_to_hbm [thread:$0]  %s2093, 16, %s7, [#allocation4], 16, 16, 1
    $region49: #{tpu_custom_call.1} parent=1 // pred_fallthru
      _
    // Predicated region
    $region50: #{tpu_custom_call.1} parent=1 // pred_check
      _
    $region51: #{tpu_custom_call.1} parent=1 // pred_check_branch
      %2100 = sbr.rel (0) target = $region53
    $region52: #{tpu_custom_call.1} parent=1 // pred_region
      %2101 = dma.done [#allocation4], 128
    $region53: #{tpu_custom_call.1} parent=1 // pred_fallthru
      _
    %2102 = vsyncpa [#allocation3], 1
    %2103 = vsyncpa [#allocation6], 1
    %2104 = vsyncpa [#allocation9], 1
    %2105 = vsyncpa [#allocation4], 1

</llo_original>
